<compile_context>
chip_gen: v5e
topology: v5e:2x2
jax: 0.10.0
libtpu: 0.0.40
codegen_flags: <defaults>
</compile_context>

<pallas_src>
import functools

import jax
import jax.numpy as jnp
from jax import lax
from jax.experimental import pallas as pl
from jax.experimental.pallas import tpu as pltpu

C_IN = 256
C_OUT = 256
KSIZE = 3
DILATION = 2
PAD = (KSIZE - 1) * DILATION          # 4 (causal left halo)
HALO = 128                            # lane-aligned halo block re-read from the previous tile

# Safe with f32 I/O even on v7x (64 MiB VMEM/TC); use time_tile=4096 on v5e/v6e (128 MiB VMEM).
_DEFAULT_MAX_TILE_L = 2048


def _causal_conv_kernel(x_ref, halo_ref, w_ref, b_ref, o_ref, *, compute_dtype):
    # x_ref:    (C_IN, TL)           current time tile of one batch element (NCL, time on lanes)
    # halo_ref: (C_IN, HALO)         last HALO time columns of the PREVIOUS tile (re-read from
    #                                HBM; contents are ignored on the first tile of each batch)
    # w_ref:    (KSIZE, C_OUT, C_IN) per-tap weight matrices (resident)
    # b_ref:    (C_OUT, 1)           f32 bias
    # o_ref:    (C_OUT, TL)          output tile
    t = pl.program_id(1)
    TL = o_ref.shape[-1]
    HB = halo_ref.shape[-1]

    x_cur = x_ref[...].astype(compute_dtype)                            # (C_IN, TL)

    # Tap k=2 reads x at the same time index -> lane-aligned (C_OUT,C_IN)@(C_IN,TL) MXU matmul.
    acc = jnp.dot(w_ref[KSIZE - 1], x_cur, preferred_element_type=jnp.float32)

    # Taps k=0 (shift PAD=4) and k=1 (shift DILATION=2): the in-tile part is x shifted right
    # along the lane axis (XLU roll) with the leading columns zeroed (VPU select).  Those zeroed
    # columns are filled in by the halo correction below.
    col = lax.broadcasted_iota(jnp.int32, (C_IN, TL), 1)
    zero_tl = jnp.zeros_like(x_cur)
    op0 = jnp.where(col < PAD, zero_tl, pltpu.roll(x_cur, shift=PAD, axis=1))
    op1 = jnp.where(col < DILATION, zero_tl, pltpu.roll(x_cur, shift=DILATION, axis=1))
    acc = acc + jnp.dot(w_ref[0], op0, preferred_element_type=jnp.float32)
    acc = acc + jnp.dot(w_ref[1], op1, preferred_element_type=jnp.float32)

    # Cross-tile halo correction: only output columns j < PAD see the previous tile.
    #   corr[:, j] = W_0 @ x_prev[:, HB - PAD + j]       for j < PAD
    #              + W_1 @ x_prev[:, HB - DILATION + j]  for j < DILATION
    # Rolling the HB-wide halo block right by `s` places x_prev[:, HB - s + j] at column j.
    halo = halo_ref[...].astype(compute_dtype)                          # (C_IN, HB)
    col_h = lax.broadcasted_iota(jnp.int32, (C_IN, HB), 1)
    zero_h = jnp.zeros_like(halo)
    lim0 = jnp.where(t > 0, PAD, 0)        # first tile of each batch element: halo is all zeros
    lim1 = jnp.where(t > 0, DILATION, 0)
    h0 = jnp.where(col_h < lim0, pltpu.roll(halo, shift=PAD, axis=1), zero_h)
    h1 = jnp.where(col_h < lim1, pltpu.roll(halo, shift=DILATION, axis=1), zero_h)
    corr = jnp.dot(w_ref[0], h0, preferred_element_type=jnp.float32)
    corr = corr + jnp.dot(w_ref[1], h1, preferred_element_type=jnp.float32)   # (C_OUT, HB)

    bias = b_ref[...]
    if TL == HB:
        o_ref[...] = (acc + corr + bias).astype(o_ref.dtype)
    else:
        # Two lane-aligned stores (offsets 0 and HB are multiples of 128) -> unmasked vst.
        o_ref[:, pl.ds(0, HB)] = (acc[:, :HB] + corr + bias).astype(o_ref.dtype)
        o_ref[:, pl.ds(HB, TL - HB)] = (acc[:, HB:] + bias).astype(o_ref.dtype)


def _pick_time_tiling(L, time_tile):
    """Returns (tile_len, padded_len); tile_len is always a multiple of 128 (>= HALO)."""
    if time_tile is not None:
        assert time_tile % 128 == 0 and time_tile >= 128, \
            "time_tile must be a positive multiple of 128"
        tl = time_tile
    else:
        L128 = pl.cdiv(L, 128) * 128
        tl = min(L128, _DEFAULT_MAX_TILE_L)
    # Always pick the largest tile and right-pad; waste is bounded by one tile of trailing zeros.
    Lp = pl.cdiv(L, tl) * tl
    return tl, Lp


def _vmem_limit_bytes(tl, x_itemsize, out_itemsize, compute_itemsize):
    io = 2 * C_IN * tl * x_itemsize                 # double-buffered x tile
    io += 2 * C_OUT * tl * out_itemsize             # double-buffered output tile
    io += 2 * C_IN * HALO * x_itemsize              # double-buffered halo block
    io += 2 * (KSIZE * C_OUT * C_IN * compute_itemsize + C_OUT * 4)   # weights + bias
    scratch = 8 * C_IN * tl * 4                     # shifted operands / f32 accumulators headroom
    return int(min(max(io + scratch, 32 << 20), 112 << 20))


def causal_conv(x_ncl, weight, bias, *, compute_dtype=jnp.bfloat16, time_tile=None,
                out_dtype=None):
    """x_ncl: (B, 256, L); weight: (256, 256, 3); bias: (256,) -> (B, 256, L) (PyTorch semantics).

    compute_dtype: dtype fed to the MXU (bf16 default; accumulation is always f32).
    time_tile:     optional explicit time-tile length (multiple of 128); default 2048, use 4096
                   on v5e/v6e for a little more amortization.
    out_dtype:     output dtype (defaults to x dtype). bf16 in/out halves HBM traffic on the
                   HBM-bandwidth-bound generations (v6e/v7x)."""
    B, Cin, L = x_ncl.shape
    assert Cin == C_IN, Cin
    assert weight.shape == (C_OUT, C_IN, KSIZE), weight.shape
    assert bias.shape == (C_OUT,), bias.shape
    out_dtype = x_ncl.dtype if out_dtype is None else out_dtype

    tl, Lp = _pick_time_tiling(L, time_tile)
    if Lp != L:
        # Right-pad only: trailing zeros never influence valid causal outputs.
        x_ncl = jnp.pad(x_ncl, ((0, 0), (0, 0), (0, Lp - L)))

    # (KSIZE, C_OUT, C_IN): w_kio[k, co, ci] = weight[co, ci, k]; tiny one-time prep.
    w_prep = jnp.transpose(weight, (2, 0, 1)).astype(compute_dtype)
    b_prep = bias.astype(jnp.float32).reshape(C_OUT, 1)

    n_t = Lp // tl
    blocks_per_tile = tl // HALO
    kernel = functools.partial(_causal_conv_kernel, compute_dtype=compute_dtype)

    def x_map(b, t):
        return (b, 0, t)

    def halo_map(b, t):
        # Last HALO columns of the previous time tile; clamped (and masked out in-kernel) at t==0.
        return (b, 0, jnp.maximum(t * blocks_per_tile - 1, 0))

    out = pl.pallas_call(
        kernel,
        out_shape=jax.ShapeDtypeStruct((B, C_OUT, Lp), out_dtype),
        grid=(B, n_t),
        in_specs=[
            pl.BlockSpec((pl.Squeezed(), C_IN, tl), x_map),
            pl.BlockSpec((pl.Squeezed(), C_IN, HALO), halo_map),   # halo re-read of x
            pl.BlockSpec((KSIZE, C_OUT, C_IN), lambda b, t: (0, 0, 0)),
            pl.BlockSpec((C_OUT, 1), lambda b, t: (0, 0)),
        ],
        out_specs=pl.BlockSpec((pl.Squeezed(), C_OUT, tl), x_map),
        compiler_params=pltpu.CompilerParams(
            # No cross-tile carry -> both axes megacore-shardable (matters on v7x at small batch).
            dimension_semantics=("parallel", "parallel"),
            vmem_limit_bytes=_vmem_limit_bytes(
                tl, x_ncl.dtype.itemsize, jnp.dtype(out_dtype).itemsize,
                jnp.dtype(compute_dtype).itemsize),
        ),
    )(x_ncl, x_ncl, w_prep, b_prep)

    return out[:, :, :L] if Lp != L else out


def reference_causal_conv(x_ncl, weight, bias):
    # Pure-JAX reference mirroring PyTorch Conv1d(padding=4, dilation=2) + slice [:, :, :-4].
    y = lax.conv_general_dilated(
        x_ncl, weight,
        window_strides=(1,),
        padding=[(PAD, PAD)],
        rhs_dilation=(DILATION,),
        dimension_numbers=("NCH", "OIH", "NCH"),
    )
    y = y + bias[None, :, None]
    return y[:, :, :-PAD]


if __name__ == "__main__":
    key = jax.random.PRNGKey(0)
    kx1, kx2, kx3, kw, kb = jax.random.split(key, 5)

    weight = jax.random.normal(kw, (C_OUT, C_IN, KSIZE), dtype=jnp.float32) * 0.02
    bias = jax.random.normal(kb, (C_OUT,), dtype=jnp.float32) * 0.1

    # Case 1: single time tile (TL == HALO store branch), exact f32 compute path.
    B1, L1 = 2, 128
    x1 = jax.random.normal(kx1, (B1, C_IN, L1), dtype=jnp.float32)
    y1 = jax.block_until_ready(causal_conv(x1, weight, bias, compute_dtype=jnp.float32))
    y1_ref = jax.block_until_ready(reference_causal_conv(x1, weight, bias))
    assert y1.shape == (B1, C_OUT, L1), y1.shape
    assert jnp.allclose(y1, y1_ref, atol=2e-3, rtol=2e-3), float(jnp.max(jnp.abs(y1 - y1_ref)))

    # Case 2: multiple time tiles with TL > HALO -> exercises the halo re-read correction and the
    # two-chunk lane-aligned output store (f32 path, tight check).
    B2, L2 = 2, 512
    x2 = jax.random.normal(kx2, (B2, C_IN, L2), dtype=jnp.float32)
    y2 = jax.block_until_ready(
        causal_conv(x2, weight, bias, compute_dtype=jnp.float32, time_tile=256))
    y2_ref = jax.block_until_ready(reference_causal_conv(x2, weight, bias))
    assert y2.shape == (B2, C_OUT, L2), y2.shape
    assert jnp.allclose(y2, y2_ref, atol=2e-3, rtol=2e-3), float(jnp.max(jnp.abs(y2 - y2_ref)))

    # Case 2b: TL == HALO with multiple tiles (halo correction on the single-store branch).
    y2b = jax.block_until_ready(
        causal_conv(x2, weight, bias, compute_dtype=jnp.float32, time_tile=128))
    assert jnp.allclose(y2b, y2_ref, atol=2e-3, rtol=2e-3), float(jnp.max(jnp.abs(y2b - y2_ref)))

    # Case 3: non-multiple-of-128 length -> exercises right-padding + trailing slice (f32 path).
    B3, L3 = 1, 200
    x3 = jax.random.normal(kx3, (B3, C_IN, L3), dtype=jnp.float32)
    y3 = jax.block_until_ready(causal_conv(x3, weight, bias, compute_dtype=jnp.float32))
    y3_ref = jax.block_until_ready(reference_causal_conv(x3, weight, bias))
    assert y3.shape == (B3, C_OUT, L3), y3.shape
    assert jnp.allclose(y3, y3_ref, atol=2e-3, rtol=2e-3), float(jnp.max(jnp.abs(y3 - y3_ref)))

    # Case 4: default bf16 MXU path (precision-sensitive vs the f32 PyTorch reference).
    y4 = jax.block_until_ready(causal_conv(x2, weight, bias, time_tile=256))
    assert jnp.allclose(y4, y2_ref, atol=1e-1, rtol=1e-1), float(jnp.max(jnp.abs(y4 - y2_ref)))

    print("KERNEL_OK")
</pallas_src>

<mosaic_0001>
module attributes {stable_mosaic.version = 11 : i64} {
  func.func @_causal_conv_kernel(%arg0: i32, %arg1: i32, %arg2: memref<1x256x128xf32, #tpu.memory_space<vmem>>, %arg3: memref<1x256x128xf32, #tpu.memory_space<vmem>>, %arg4: memref<3x256x256xf32, #tpu.memory_space<vmem>>, %arg5: memref<256x1xf32, #tpu.memory_space<vmem>>, %arg6: memref<1x256x128xf32, #tpu.memory_space<vmem>>) attributes {dimension_semantics = [#tpu.dimension_semantics<parallel>, #tpu.dimension_semantics<parallel>], iteration_bounds = array<i64: 2, 1>, scalar_prefetch = 0 : i64, scratch_operands = 0 : i64, tpu.core_type = #tpu.core_type<tc>, window_params = [{transform_indices = @transform_0, window_bounds = array<i64: 1, 256, 128>}, {transform_indices = @transform_1, window_bounds = array<i64: 1, 256, 128>}, {pipeline_mode = #tpu.pipeline_mode<synchronous>, transform_indices = @transform_2, window_bounds = array<i64: 3, 256, 256>}, {pipeline_mode = #tpu.pipeline_mode<synchronous>, transform_indices = @transform_3, window_bounds = array<i64: 256, 1>}, {transform_indices = @transform_4, window_bounds = array<i64: 1, 256, 128>}]} {
    %c0 = arith.constant 0 : index
    %c0_0 = arith.constant 0 : index
    %c0_1 = arith.constant 0 : index
    %0 = vector.load %arg2[%c0, %c0_0, %c0_1] : memref<1x256x128xf32, #tpu.memory_space<vmem>>, vector<1x256x128xf32>
    %1 = vector.shape_cast %0 : vector<1x256x128xf32> to vector<256x128xf32>
    %c2 = arith.constant 2 : index
    %c0_2 = arith.constant 0 : index
    %c0_3 = arith.constant 0 : index
    %2 = vector.load %arg4[%c2, %c0_2, %c0_3] : memref<3x256x256xf32, #tpu.memory_space<vmem>>, vector<1x256x256xf32>
    %3 = vector.shape_cast %2 : vector<1x256x256xf32> to vector<256x256xf32>
    %cst = arith.constant dense<0.000000e+00> : vector<256x128xf32>
    %4 = tpu.matmul %3, %1, %cst {dimension_numbers = #tpu.dot_dimension_numbers<[1], [0], [0], [1], [0, 0, 1, 1], [], []>} : vector<256x256xf32>, vector<256x128xf32>, vector<256x128xf32> -> vector<256x128xf32>
    %5 = tpu.iota {dimensions = array<i32: 1>} : vector<256x128xi32>
    %cst_4 = arith.constant 0.000000e+00 : f32
    %6 = vector.broadcast %cst_4 : f32 to vector<256x128xf32>
    %c4_i32 = arith.constant 4 : i32
    %7 = vector.broadcast %c4_i32 : i32 to vector<256x128xi32>
    %8 = arith.cmpi slt, %5, %7 : vector<256x128xi32>
    %c4_i32_5 = arith.constant 4 : i32
    %9 = tpu.dynamic_rotate %1 by %c4_i32_5 dim 1 : vector<256x128xf32>, i32 -> vector<256x128xf32>
    %10 = arith.select %8, %6, %9 : vector<256x128xi1>, vector<256x128xf32>
    %c2_i32 = arith.constant 2 : i32
    %11 = vector.broadcast %c2_i32 : i32 to vector<256x128xi32>
    %12 = arith.cmpi slt, %5, %11 : vector<256x128xi32>
    %c2_i32_6 = arith.constant 2 : i32
    %13 = tpu.dynamic_rotate %1 by %c2_i32_6 dim 1 : vector<256x128xf32>, i32 -> vector<256x128xf32>
    %14 = arith.select %12, %6, %13 : vector<256x128xi1>, vector<256x128xf32>
    %c0_7 = arith.constant 0 : index
    %c0_8 = arith.constant 0 : index
    %c0_9 = arith.constant 0 : index
    %15 = vector.load %arg4[%c0_7, %c0_8, %c0_9] : memref<3x256x256xf32, #tpu.memory_space<vmem>>, vector<1x256x256xf32>
    %16 = vector.shape_cast %15 : vector<1x256x256xf32> to vector<256x256xf32>
    %cst_10 = arith.constant dense<0.000000e+00> : vector<256x128xf32>
    %17 = tpu.matmul %16, %10, %cst_10 {dimension_numbers = #tpu.dot_dimension_numbers<[1], [0], [0], [1], [0, 0, 1, 1], [], []>} : vector<256x256xf32>, vector<256x128xf32>, vector<256x128xf32> -> vector<256x128xf32>
    %18 = arith.addf %4, %17 : vector<256x128xf32>
    %c1 = arith.constant 1 : index
    %c0_11 = arith.constant 0 : index
    %c0_12 = arith.constant 0 : index
    %19 = vector.load %arg4[%c1, %c0_11, %c0_12] : memref<3x256x256xf32, #tpu.memory_space<vmem>>, vector<1x256x256xf32>
    %20 = vector.shape_cast %19 : vector<1x256x256xf32> to vector<256x256xf32>
    %cst_13 = arith.constant dense<0.000000e+00> : vector<256x128xf32>
    %21 = tpu.matmul %20, %14, %cst_13 {dimension_numbers = #tpu.dot_dimension_numbers<[1], [0], [0], [1], [0, 0, 1, 1], [], []>} : vector<256x256xf32>, vector<256x128xf32>, vector<256x128xf32> -> vector<256x128xf32>
    %22 = arith.addf %18, %21 : vector<256x128xf32>
    %c0_14 = arith.constant 0 : index
    %c0_15 = arith.constant 0 : index
    %c0_16 = arith.constant 0 : index
    %23 = vector.load %arg3[%c0_14, %c0_15, %c0_16] : memref<1x256x128xf32, #tpu.memory_space<vmem>>, vector<1x256x128xf32>
    %24 = vector.shape_cast %23 : vector<1x256x128xf32> to vector<256x128xf32>
    %25 = tpu.iota {dimensions = array<i32: 1>} : vector<256x128xi32>
    %cst_17 = arith.constant 0.000000e+00 : f32
    %26 = vector.broadcast %cst_17 : f32 to vector<256x128xf32>
    %c0_i32 = arith.constant 0 : i32
    %27 = arith.cmpi sgt, %arg1, %c0_i32 : i32
    %c4_i32_18 = arith.constant 4 : i32
    %c0_i32_19 = arith.constant 0 : i32
    %28 = arith.select %27, %c4_i32_18, %c0_i32_19 : i32
    %c0_i32_20 = arith.constant 0 : i32
    %29 = arith.cmpi sgt, %arg1, %c0_i32_20 : i32
    %c2_i32_21 = arith.constant 2 : i32
    %c0_i32_22 = arith.constant 0 : i32
    %30 = arith.select %29, %c2_i32_21, %c0_i32_22 : i32
    %31 = vector.broadcast %28 : i32 to vector<256x128xi32>
    %32 = arith.cmpi slt, %25, %31 : vector<256x128xi32>
    %c4_i32_23 = arith.constant 4 : i32
    %33 = tpu.dynamic_rotate %24 by %c4_i32_23 dim 1 : vector<256x128xf32>, i32 -> vector<256x128xf32>
    %34 = arith.select %32, %33, %26 : vector<256x128xi1>, vector<256x128xf32>
    %35 = vector.broadcast %30 : i32 to vector<256x128xi32>
    %36 = arith.cmpi slt, %25, %35 : vector<256x128xi32>
    %c2_i32_24 = arith.constant 2 : i32
    %37 = tpu.dynamic_rotate %24 by %c2_i32_24 dim 1 : vector<256x128xf32>, i32 -> vector<256x128xf32>
    %38 = arith.select %36, %37, %26 : vector<256x128xi1>, vector<256x128xf32>
    %c0_25 = arith.constant 0 : index
    %c0_26 = arith.constant 0 : index
    %c0_27 = arith.constant 0 : index
    %39 = vector.load %arg4[%c0_25, %c0_26, %c0_27] : memref<3x256x256xf32, #tpu.memory_space<vmem>>, vector<1x256x256xf32>
    %40 = vector.shape_cast %39 : vector<1x256x256xf32> to vector<256x256xf32>
    %cst_28 = arith.constant dense<0.000000e+00> : vector<256x128xf32>
    %41 = tpu.matmul %40, %34, %cst_28 {dimension_numbers = #tpu.dot_dimension_numbers<[1], [0], [0], [1], [0, 0, 1, 1], [], []>} : vector<256x256xf32>, vector<256x128xf32>, vector<256x128xf32> -> vector<256x128xf32>
    %c1_29 = arith.constant 1 : index
    %c0_30 = arith.constant 0 : index
    %c0_31 = arith.constant 0 : index
    %42 = vector.load %arg4[%c1_29, %c0_30, %c0_31] : memref<3x256x256xf32, #tpu.memory_space<vmem>>, vector<1x256x256xf32>
    %43 = vector.shape_cast %42 : vector<1x256x256xf32> to vector<256x256xf32>
    %cst_32 = arith.constant dense<0.000000e+00> : vector<256x128xf32>
    %44 = tpu.matmul %43, %38, %cst_32 {dimension_numbers = #tpu.dot_dimension_numbers<[1], [0], [0], [1], [0, 0, 1, 1], [], []>} : vector<256x256xf32>, vector<256x128xf32>, vector<256x128xf32> -> vector<256x128xf32>
    %45 = arith.addf %41, %44 : vector<256x128xf32>
    %c0_33 = arith.constant 0 : index
    %c0_34 = arith.constant 0 : index
    %46 = vector.load %arg5[%c0_33, %c0_34] : memref<256x1xf32, #tpu.memory_space<vmem>>, vector<256x1xf32>
    %47 = arith.addf %22, %45 : vector<256x128xf32>
    %48 = vector.broadcast %46 : vector<256x1xf32> to vector<256x128xf32>
    %49 = arith.addf %47, %48 : vector<256x128xf32>
    %c0_35 = arith.constant 0 : index
    %c0_36 = arith.constant 0 : index
    %c0_37 = arith.constant 0 : index
    %50 = vector.load %arg6[%c0_35, %c0_36, %c0_37] : memref<1x256x128xf32, #tpu.memory_space<vmem>>, vector<1x256x128xf32>
    %51 = vector.shape_cast %50 : vector<1x256x128xf32> to vector<256x128xf32>
    %52 = vector.shape_cast %49 : vector<256x128xf32> to vector<1x256x128xf32>
    tpu.vector_store %arg6[%c0_35, %c0_36, %c0_37], %52 {strides = array<i32>} : memref<1x256x128xf32, #tpu.memory_space<vmem>>, vector<1x256x128xf32>,
    return
  }
  func.func @transform_0(%arg0: i32, %arg1: i32) -> (i32, i32, i32) {
    %c0_i32 = arith.constant 0 : i32
    %c0_i32_0 = arith.constant 0 : i32
    return %arg0, %c0_i32, %arg1 : i32, i32, i32
  }
  func.func @transform_1(%arg0: i32, %arg1: i32) -> (i32, i32, i32) {
    %c1_i32 = arith.constant 1 : i32
    %0 = arith.muli %arg1, %c1_i32 : i32
    %c1_i32_0 = arith.constant 1 : i32
    %1 = arith.subi %0, %c1_i32_0 : i32
    %c0_i32 = arith.constant 0 : i32
    %2 = arith.maxsi %1, %c0_i32 : i32
    %c0_i32_1 = arith.constant 0 : i32
    %c0_i32_2 = arith.constant 0 : i32
    return %arg0, %c0_i32_1, %2 : i32, i32, i32
  }
  func.func @transform_2(%arg0: i32, %arg1: i32) -> (i32, i32, i32) {
    %c0_i32 = arith.constant 0 : i32
    %c0_i32_0 = arith.constant 0 : i32
    %c0_i32_1 = arith.constant 0 : i32
    %c0_i32_2 = arith.constant 0 : i32
    return %c0_i32, %c0_i32_0, %c0_i32_1 : i32, i32, i32
  }
  func.func @transform_3(%arg0: i32, %arg1: i32) -> (i32, i32) {
    %c0_i32 = arith.constant 0 : i32
    %c0_i32_0 = arith.constant 0 : i32
    %c0_i32_1 = arith.constant 0 : i32
    return %c0_i32, %c0_i32_0 : i32, i32
  }
  func.func @transform_4(%arg0: i32, %arg1: i32) -> (i32, i32, i32) {
    %c0_i32 = arith.constant 0 : i32
    %c0_i32_0 = arith.constant 0 : i32
    return %arg0, %c0_i32, %arg1 : i32, i32, i32
  }
}

</mosaic_0001>

<llo_original>
// kernel: tpu_custom_call.1
$region0: #{tpu_custom_call.1}
  #allocation0 [shape = 'u32[]', space=smem, size = 0x4, offset = 0x4, fixed_abs, tag = 'smem constant byte address 0x4 - core index']
  #allocation1 [shape = 'u32[72,128]{1,0:T(1,128)}', space=vmem, size = 0x9000, scoped, tag = 'internal scratch']
  %s0 = inlined_call_operand.hbm [shape: f32[2,256,128], index: 0, kind: input, shape index: {}]
  %s1 = inlined_call_operand.hbm [shape: f32[2,256,128], index: 1, kind: input, shape index: {}]
  %s2 = inlined_call_operand.hbm [shape: f32[3,256,256], index: 2, kind: input, shape index: {}]
  %s3 = inlined_call_operand.vmem [shape: f32[256,1], index: 3, kind: input, shape index: {}]
  %s4 = inlined_call_operand.hbm [shape: f32[2,256,128], index: 4, kind: output, shape index: {}]
  %s5 = sld [smem:[#allocation0]]
  $region61: #{tpu_custom_call.1} parent=0
    _
  %s7 = ssub.s32 1, %s5
  %s8 = scalar_select 0, %s7, %s5
  $region1: #{tpu_custom_call.1} parent=0
    #allocation2 [shape = 'u8[262144]{0}', space=vmem, size = 0x40000, scoped, tag = 'input window, operand 0']
    #allocation3 [shape = 's32[2]{0}', space=sflag, size = 0x8, scoped, tag = 'scoped memory for tpu_custom_call.1']
    #allocation4 [shape = 's32[2]{0}', space=sflag, size = 0x8, scoped, tag = 'scoped memory for tpu_custom_call.1']
    #allocation5 [shape = 'u8[262144]{0}', space=vmem, size = 0x40000, scoped, tag = 'input window, operand 1']
    #allocation6 [shape = 's32[2]{0}', space=sflag, size = 0x8, scoped, tag = 'scoped memory for tpu_custom_call.1']
    #allocation7 [shape = 'u8[786432]{0}', space=vmem, size = 0xc0000, scoped, tag = 'input window, operand 2, single buffered']
    #allocation8 [shape = 'u8[262144]{0}', space=vmem, size = 0x40000, scoped, tag = 'output window, operand 0']
    %9 = vsyncpa [#allocation3], 0
    %s10 = scalar_lea.sflag [#allocation3], 1
    %11 = vsyncpa %s10, 0
    %12 = vsyncpa [#allocation6], 0
    %s13 = scalar_lea.sflag [#allocation6], 1
    %14 = vsyncpa %s13, 0
    %15 = vsyncpa [#allocation4], 0
    %s16 = scalar_lea.sflag [#allocation4], 1
    %17 = vsyncpa %s16, 0
    loop: start=0, step=1, limit=4
    $region2: #{tpu_custom_call.1} parent=1 // loop_pre_header
      _
    $region3: #{tpu_custom_call.1} parent=1 // loop_header
      %s19 = sphi 0, %s23
      %p20 = scmp.ge.s32.totalorder %s19, 4
      %s26 = sphi 0, %s38
      %s27 = sphi 0, %s34
      %s28 = sphi 0, %s26
      %s29 = sphi 0, %s27
      %s30 = sphi 0, %s28
      %s31 = sphi 0, %s29
      %s43 = sphi 0, %s45
      %s46 = sphi 0, %s43
      %s47 = sphi 0, %s46
      %s63 = sphi 0, %s47
      %s77 = sphi 0, %s79
      %s80 = sphi 0, %s77
      %s81 = sphi 0, %s80
      %s97 = sphi 0, %s81
      %s101 = sphi 0, %s101
      %s103 = sphi 0, %s101
      %s104 = sphi 0, %s103
      %s118 = sphi 0, %s104
      %s122 = sphi 0, %s122
      %s124 = sphi 0, %s122
      %s125 = sphi 0, %s124
      %s139 = sphi 0, %s125
      %s147 = sphi 0, %s149
      %s150 = sphi 0, %s147
      %s151 = sphi 0, %s150
      %s167 = sphi 0, %s151
    $region4: #{tpu_custom_call.1} parent=1 // loop_header_branch
      %22 = sbr.rel (%p20) target = $region8
    $region5: #{tpu_custom_call.1} parent=1 // loop_body
      %s24 = ssub.s32 %s19, 1
      %s25 = ssub.s32 %s19, 2
      %s32 = sadd.s32 1, %s27
      %p33 = scmp.ge.s32.totalorder %s32, 1
      %s34 = scalar_select %p33, 0, %s32
      %s35 = sadd.s32 1, %s26
      %s36 = scalar_select %p33, %s35, %s26
      %p37 = scmp.ge.s32.totalorder %s36, 2
      %s38 = scalar_select %p37, 0, %s36
      %s39 = ssub.s32 %s26, %s38
      %s40 = ssub.s32 %s27, %s34
      %s41 = sor.u32 %s39, %s40
      %p42 = scmp.eq.s32.totalorder %s41, 0
      %s44 = sadd.s32 %s43, 1
      %s45 = scalar_select %p42, %s43, %s44
      %p48 = pneg %p42
      %p49 = scmp.eq.s32.totalorder %s19, 1
      %p50 = por %p48, %p49
      %p51 = scmp.ne.s32.totalorder %s43, %s46
      %p52 = scmp.eq.s32.totalorder %s19, 0
      %p53 = por %p51, %p52
      %p54 = scmp.ne.s32.totalorder %s43, %s46
      %p55 = scmp.eq.s32.totalorder %s24, 1
      %p56 = por %p54, %p55
      %p57 = scmp.ne.s32.totalorder %s46, %s47
      %p58 = scmp.eq.s32.totalorder %s24, 0
      %p59 = por %p57, %p58
      %p60 = scmp.ne.s32.totalorder %s46, %s47
      %p61 = scmp.eq.s32.totalorder %s25, 1
      %p62 = por %p60, %p61
      %p64 = scmp.ne.s32.totalorder %s47, %s63
      %p65 = scmp.eq.s32.totalorder %s25, 0
      %p66 = por %p64, %p65
      %s67 = ssub.s32 %s27, 1
      %p68 = scmp.gt.s32.totalorder %s67, 0
      %s69 = scalar_select %p68, %s67, 0
      %s70 = ssub.s32 %s34, 1
      %p71 = scmp.gt.s32.totalorder %s70, 0
      %s72 = scalar_select %p71, %s70, 0
      %s73 = ssub.s32 %s26, %s38
      %s74 = ssub.s32 %s69, %s72
      %s75 = sor.u32 %s73, %s74
      %p76 = scmp.eq.s32.totalorder %s75, 0
      %s78 = sadd.s32 %s77, 1
      %s79 = scalar_select %p76, %s77, %s78
      %p82 = pneg %p76
      %p83 = scmp.eq.s32.totalorder %s19, 1
      %p84 = por %p82, %p83
      %p85 = scmp.ne.s32.totalorder %s77, %s80
      %p86 = scmp.eq.s32.totalorder %s19, 0
      %p87 = por %p85, %p86
      %p88 = scmp.ne.s32.totalorder %s77, %s80
      %p89 = scmp.eq.s32.totalorder %s24, 1
      %p90 = por %p88, %p89
      %p91 = scmp.ne.s32.totalorder %s80, %s81
      %p92 = scmp.eq.s32.totalorder %s24, 0
      %p93 = por %p91, %p92
      %p94 = scmp.ne.s32.totalorder %s80, %s81
      %p95 = scmp.eq.s32.totalorder %s25, 1
      %p96 = por %p94, %p95
      %p98 = scmp.ne.s32.totalorder %s81, %s97
      %p99 = scmp.eq.s32.totalorder %s25, 0
      %p100 = por %p98, %p99
      %s102 = sadd.s32 %s101, 1
      %p105 = scmp.eq.s32.totalorder %s19, 1
      %p106 = scmp.ne.s32.totalorder %s101, %s103
      %p107 = scmp.eq.s32.totalorder %s19, 0
      %p108 = por %p106, %p107
      %p109 = scmp.ne.s32.totalorder %s101, %s103
      %p110 = scmp.eq.s32.totalorder %s24, 1
      %p111 = por %p109, %p110
      %p112 = scmp.ne.s32.totalorder %s103, %s104
      %p113 = scmp.eq.s32.totalorder %s24, 0
      %p114 = por %p112, %p113
      %p115 = scmp.ne.s32.totalorder %s103, %s104
      %p116 = scmp.eq.s32.totalorder %s25, 1
      %p117 = por %p115, %p116
      %p119 = scmp.ne.s32.totalorder %s104, %s118
      %p120 = scmp.eq.s32.totalorder %s25, 0
      %p121 = por %p119, %p120
      %s123 = sadd.s32 %s122, 1
      %p126 = scmp.eq.s32.totalorder %s19, 1
      %p127 = scmp.ne.s32.totalorder %s122, %s124
      %p128 = scmp.eq.s32.totalorder %s19, 0
      %p129 = por %p127, %p128
      %p130 = scmp.ne.s32.totalorder %s122, %s124
      %p131 = scmp.eq.s32.totalorder %s24, 1
      %p132 = por %p130, %p131
      %p133 = scmp.ne.s32.totalorder %s124, %s125
      %p134 = scmp.eq.s32.totalorder %s24, 0
      %p135 = por %p133, %p134
      %p136 = scmp.ne.s32.totalorder %s124, %s125
      %p137 = scmp.eq.s32.totalorder %s25, 1
      %p138 = por %p136, %p137
      %p140 = scmp.ne.s32.totalorder %s125, %s139
      %p141 = scmp.eq.s32.totalorder %s25, 0
      %p142 = por %p140, %p141
      %s143 = ssub.s32 %s26, %s38
      %s144 = ssub.s32 %s27, %s34
      %s145 = sor.u32 %s143, %s144
      %p146 = scmp.eq.s32.totalorder %s145, 0
      %s148 = sadd.s32 %s147, 1
      %s149 = scalar_select %p146, %s147, %s148
      %p152 = pneg %p146
      %p153 = scmp.eq.s32.totalorder %s19, 1
      %p154 = por %p152, %p153
      %p155 = scmp.ne.s32.totalorder %s147, %s150
      %p156 = scmp.eq.s32.totalorder %s19, 0
      %p157 = por %p155, %p156
      %p158 = scmp.ne.s32.totalorder %s147, %s150
      %p159 = scmp.eq.s32.totalorder %s24, 1
      %p160 = por %p158, %p159
      %p161 = scmp.ne.s32.totalorder %s150, %s151
      %p162 = scmp.eq.s32.totalorder %s24, 0
      %p163 = por %p161, %p162
      %p164 = scmp.ne.s32.totalorder %s150, %s151
      %p165 = scmp.eq.s32.totalorder %s25, 1
      %p166 = por %p164, %p165
      %p168 = scmp.ne.s32.totalorder %s151, %s167
      %p169 = scmp.eq.s32.totalorder %s25, 0
      %p170 = por %p168, %p169
      %p171 = scmp.le.s32.totalorder 1, %s19
      %p172 = scmp.lt.s32.totalorder %s19, 3
      %p173 = pnand %p171, %p172
      %p174 = pneg %p173
      // Predicated region
      $region9: #{tpu_custom_call.1} parent=5 // pred_check
        _
      $region10: #{tpu_custom_call.1} parent=5 // pred_check_branch
        %176 = sbr.rel (%p173) target = $region12
      $region11: #{tpu_custom_call.1} parent=5 // pred_region
        %s177 = ssub.s32 %s19, 1
        // Predicated region
        $region13: #{tpu_custom_call.1} parent=11 // pred_check
          %p178 = pneg %p114
        $region14: #{tpu_custom_call.1} parent=11 // pred_check_branch
          %180 = sbr.rel (%p178) target = $region16
        $region15: #{tpu_custom_call.1} parent=11 // pred_region
          %182 = vsyncadd [#allocation6], 0
          %s183 = sshll.u32 %s2, 4
          %s184 = int_to_ptr.hbm [resolvable:$true] %s183
          %s185 = sshll.u32 [#allocation7], 4
          %s186 = int_to_ptr.vmem [resolvable:$true] %s185
          %191 = dma.hbm_to_vmem [thread:$0]  %s184, 24576, %s186, [#allocation6], 256, 256, 16
        $region16: #{tpu_custom_call.1} parent=11 // pred_fallthru
          _
        // Predicated region
        $region17: #{tpu_custom_call.1} parent=11 // pred_check
          %p192 = pneg %p135
        $region18: #{tpu_custom_call.1} parent=11 // pred_check_branch
          %194 = sbr.rel (%p192) target = $region20
        $region19: #{tpu_custom_call.1} parent=11 // pred_region
          _
        $region20: #{tpu_custom_call.1} parent=11 // pred_fallthru
          _
      $region12: #{tpu_custom_call.1} parent=5 // pred_fallthru
        _
      %p195 = scmp.lt.s32.totalorder %s19, 2
      // Predicated region
      $region21: #{tpu_custom_call.1} parent=5 // pred_check
        %p196 = pneg %p195
      $region22: #{tpu_custom_call.1} parent=5 // pred_check_branch
        %198 = sbr.rel (%p196) target = $region24
      $region23: #{tpu_custom_call.1} parent=5 // pred_region
        // Predicated region
        $region25: #{tpu_custom_call.1} parent=23 // pred_check
          %p199 = pneg %p53
        $region26: #{tpu_custom_call.1} parent=23 // pred_check_branch
          %201 = sbr.rel (%p199) target = $region28
        $region27: #{tpu_custom_call.1} parent=23 // pred_region
          %s202 = sand.u32 %s43, 1
          %s203 = scalar_lea.sflag [#allocation3], %s202
          %s204 = sand.u32 %s43, 1
          %s205 = smul.addr %s204, 256
          %s206 = scalar_lea.vmem [#allocation2], %s205
          %208 = vsyncadd %s203, 0
          %s209 = smul.addr %s26, 32
          %s210 = sadd.s32 %s27, %s209
          %s211 = smul.addr %s210, 8
          %s212 = scalar_lea.hbm %s0, %s211
          %s213 = sshll.u32 %s212, 4
          %s214 = int_to_ptr.hbm [resolvable:$true] %s213
          %s215 = sshll.u32 %s206, 4
          %s216 = int_to_ptr.vmem [resolvable:$true] %s215
          %221 = dma.hbm_to_vmem [thread:$0]  %s214, 4096, %s216, %s203, 128, 128, 8
        $region28: #{tpu_custom_call.1} parent=23 // pred_fallthru
          _
        // Predicated region
        $region29: #{tpu_custom_call.1} parent=23 // pred_check
          %p222 = pneg %p87
        $region30: #{tpu_custom_call.1} parent=23 // pred_check_branch
          %224 = sbr.rel (%p222) target = $region32
        $region31: #{tpu_custom_call.1} parent=23 // pred_region
          %s225 = sand.u32 %s19, 1
          %s226 = scalar_lea.sflag [#allocation6], %s225
          %s227 = sand.u32 %s77, 1
          %s228 = smul.addr %s227, 256
          %s229 = scalar_lea.vmem [#allocation5], %s228
          %s230 = ssub.s32 %s27, 1
          %p231 = scmp.gt.s32.totalorder %s230, 0
          %s232 = scalar_select %p231, %s230, 0
          %234 = vsyncadd %s226, 0
          %s235 = smul.addr %s26, 32
          %s236 = sadd.s32 %s232, %s235
          %s237 = smul.addr %s236, 8
          %s238 = scalar_lea.hbm %s1, %s237
          %s239 = sshll.u32 %s238, 4
          %s240 = int_to_ptr.hbm [resolvable:$true] %s239
          %s241 = sshll.u32 %s229, 4
          %s242 = int_to_ptr.vmem [resolvable:$true] %s241
          %247 = dma.hbm_to_vmem [thread:$0]  %s240, 4096, %s242, %s226, 128, 128, 8
        $region32: #{tpu_custom_call.1} parent=23 // pred_fallthru
          _
      $region24: #{tpu_custom_call.1} parent=5 // pred_fallthru
        _
      %p248 = scmp.le.s32.totalorder 1, %s19
      %p249 = scmp.lt.s32.totalorder %s19, 3
      %p250 = pnand %p248, %p249
      %p251 = pneg %p250
      // Predicated region
      $region33: #{tpu_custom_call.1} parent=5 // pred_check
        _
      $region34: #{tpu_custom_call.1} parent=5 // pred_check_branch
        %253 = sbr.rel (%p250) target = $region36
      $region35: #{tpu_custom_call.1} parent=5 // pred_region
        %s254 = ssub.s32 %s19, 1
        %s255 = sand.u32 %s46, 1
        %s256 = scalar_lea.sflag [#allocation3], %s255
        %s257 = sand.u32 %s46, 1
        %s258 = smul.addr %s257, 256
        %s259 = scalar_lea.vmem [#allocation2], %s258
        // Predicated region
        $region37: #{tpu_custom_call.1} parent=35 // pred_check
          %p260 = pneg %p59
        $region38: #{tpu_custom_call.1} parent=35 // pred_check_branch
          %262 = sbr.rel (%p260) target = $region40
        $region39: #{tpu_custom_call.1} parent=35 // pred_region
          %264 = dma.done %s256, 4096
        $region40: #{tpu_custom_call.1} parent=35 // pred_fallthru
          _
        %s265 = sand.u32 %s24, 1
        %s266 = scalar_lea.sflag [#allocation6], %s265
        %s267 = sand.u32 %s80, 1
        %s268 = smul.addr %s267, 256
        %s269 = scalar_lea.vmem [#allocation5], %s268
        // Predicated region
        $region41: #{tpu_custom_call.1} parent=35 // pred_check
          %p270 = pneg %p93
        $region42: #{tpu_custom_call.1} parent=35 // pred_check_branch
          %272 = sbr.rel (%p270) target = $region44
        $region43: #{tpu_custom_call.1} parent=35 // pred_region
          %274 = dma.done %s266, 4096
        $region44: #{tpu_custom_call.1} parent=35 // pred_fallthru
          _
        // Predicated region
        $region45: #{tpu_custom_call.1} parent=35 // pred_check
          %p275 = pneg %p114
        $region46: #{tpu_custom_call.1} parent=35 // pred_check_branch
          %277 = sbr.rel (%p275) target = $region48
        $region47: #{tpu_custom_call.1} parent=35 // pred_region
          %279 = dma.done [#allocation6], 24576
        $region48: #{tpu_custom_call.1} parent=35 // pred_fallthru
          _
        %s280 = sand.u32 %s46, 1
        %s281 = scalar_lea.sflag [#allocation3], %s280
        %s282 = sand.u32 %s46, 1
        %s283 = smul.addr %s282, 256
        %s284 = scalar_lea.vmem [#allocation2], %s283
        %p285 = pneg %p59
        %p286 = pneg %p56
        %s287 = sand.u32 %s24, 1
        %s288 = scalar_lea.sflag [#allocation6], %s287
        %s289 = sand.u32 %s80, 1
        %s290 = smul.addr %s289, 256
        %s291 = scalar_lea.vmem [#allocation5], %s290
        %p292 = pneg %p93
        %p293 = pneg %p90
        %p294 = pneg %p114
        %p295 = pneg %p111
        %p296 = pneg %p135
        %p297 = pneg %p132
        %p298 = pneg %p163
        %p299 = pneg %p160
        %s300 = sand.u32 %s150, 1
        %s301 = scalar_lea.sflag [#allocation4], %s300
        %s302 = sand.u32 %s150, 1
        %s303 = smul.addr %s302, 256
        %s304 = scalar_lea.vmem [#allocation8], %s303
        %s305 = ssub.s32 %s29, 1
        %p306 = scmp.gt.s32.totalorder %s305, 0
        %s307 = scalar_select %p306, %s305, 0
        %v308 = vld [vmem:[%s259] sm:$0xff]
        %v309 = vld [vmem:[%s259 + $0x8] sm:$0xff]
        %v310 = vld [vmem:[%s259 + $0x10] sm:$0xff]
        %v311 = vld [vmem:[%s259 + $0x18] sm:$0xff]
        %v312 = vld [vmem:[%s259 + $0x20] sm:$0xff]
        %v313 = vld [vmem:[%s259 + $0x28] sm:$0xff]
        %v314 = vld [vmem:[%s259 + $0x30] sm:$0xff]
        %v315 = vld [vmem:[%s259 + $0x38] sm:$0xff]
        %v316 = vld [vmem:[%s259 + $0x40] sm:$0xff]
        %v317 = vld [vmem:[%s259 + $0x48] sm:$0xff]
        %v318 = vld [vmem:[%s259 + $0x50] sm:$0xff]
        %v319 = vld [vmem:[%s259 + $0x58] sm:$0xff]
        %v320 = vld [vmem:[%s259 + $0x60] sm:$0xff]
        %v321 = vld [vmem:[%s259 + $0x68] sm:$0xff]
        %v322 = vld [vmem:[%s259 + $0x70] sm:$0xff]
        %v323 = vld [vmem:[%s259 + $0x78] sm:$0xff]
        %v324 = vld [vmem:[%s259 + $0x80] sm:$0xff]
        %v325 = vld [vmem:[%s259 + $0x88] sm:$0xff]
        %v326 = vld [vmem:[%s259 + $0x90] sm:$0xff]
        %v327 = vld [vmem:[%s259 + $0x98] sm:$0xff]
        %v328 = vld [vmem:[%s259 + $0xa0] sm:$0xff]
        %v329 = vld [vmem:[%s259 + $0xa8] sm:$0xff]
        %v330 = vld [vmem:[%s259 + $0xb0] sm:$0xff]
        %v331 = vld [vmem:[%s259 + $0xb8] sm:$0xff]
        %v332 = vld [vmem:[%s259 + $0xc0] sm:$0xff]
        %v333 = vld [vmem:[%s259 + $0xc8] sm:$0xff]
        %v334 = vld [vmem:[%s259 + $0xd0] sm:$0xff]
        %v335 = vld [vmem:[%s259 + $0xd8] sm:$0xff]
        %v336 = vld [vmem:[%s259 + $0xe0] sm:$0xff]
        %v337 = vld [vmem:[%s259 + $0xe8] sm:$0xff]
        %v338 = vld [vmem:[%s259 + $0xf0] sm:$0xff]
        %v339 = vld [vmem:[%s259 + $0xf8] sm:$0xff]
        %s340 = scalar_lea.vmem [#allocation7], 1024
        %v341 = vld [vmem:[%s340] sm:$0xff]
        %v342 = vld [vmem:[%s340 + $0x8] sm:$0xff]
        %v343 = vld [vmem:[%s340 + $0x10] sm:$0xff]
        %v344 = vld [vmem:[%s340 + $0x18] sm:$0xff]
        %v345 = vld [vmem:[%s340 + $0x20] sm:$0xff]
        %v346 = vld [vmem:[%s340 + $0x28] sm:$0xff]
        %v347 = vld [vmem:[%s340 + $0x30] sm:$0xff]
        %v348 = vld [vmem:[%s340 + $0x38] sm:$0xff]
        %v349 = vld [vmem:[%s340 + $0x40] sm:$0xff]
        %v350 = vld [vmem:[%s340 + $0x48] sm:$0xff]
        %v351 = vld [vmem:[%s340 + $0x50] sm:$0xff]
        %v352 = vld [vmem:[%s340 + $0x58] sm:$0xff]
        %v353 = vld [vmem:[%s340 + $0x60] sm:$0xff]
        %v354 = vld [vmem:[%s340 + $0x68] sm:$0xff]
        %v355 = vld [vmem:[%s340 + $0x70] sm:$0xff]
        %v356 = vld [vmem:[%s340 + $0x78] sm:$0xff]
        %v357 = vld [vmem:[%s340 + $0x80] sm:$0xff]
        %v358 = vld [vmem:[%s340 + $0x88] sm:$0xff]
        %v359 = vld [vmem:[%s340 + $0x90] sm:$0xff]
        %v360 = vld [vmem:[%s340 + $0x98] sm:$0xff]
        %v361 = vld [vmem:[%s340 + $0xa0] sm:$0xff]
        %v362 = vld [vmem:[%s340 + $0xa8] sm:$0xff]
        %v363 = vld [vmem:[%s340 + $0xb0] sm:$0xff]
        %v364 = vld [vmem:[%s340 + $0xb8] sm:$0xff]
        %v365 = vld [vmem:[%s340 + $0xc0] sm:$0xff]
        %v366 = vld [vmem:[%s340 + $0xc8] sm:$0xff]
        %v367 = vld [vmem:[%s340 + $0xd0] sm:$0xff]
        %v368 = vld [vmem:[%s340 + $0xd8] sm:$0xff]
        %v369 = vld [vmem:[%s340 + $0xe0] sm:$0xff]
        %v370 = vld [vmem:[%s340 + $0xe8] sm:$0xff]
        %v371 = vld [vmem:[%s340 + $0xf0] sm:$0xff]
        %v372 = vld [vmem:[%s340 + $0xf8] sm:$0xff]
        %v373 = vld [vmem:[%s340 + $0x100] sm:$0xff]
        %v374 = vld [vmem:[%s340 + $0x108] sm:$0xff]
        %v375 = vld [vmem:[%s340 + $0x110] sm:$0xff]
        %v376 = vld [vmem:[%s340 + $0x118] sm:$0xff]
        %v377 = vld [vmem:[%s340 + $0x120] sm:$0xff]
        %v378 = vld [vmem:[%s340 + $0x128] sm:$0xff]
        %v379 = vld [vmem:[%s340 + $0x130] sm:$0xff]
        %v380 = vld [vmem:[%s340 + $0x138] sm:$0xff]
        %v381 = vld [vmem:[%s340 + $0x140] sm:$0xff]
        %v382 = vld [vmem:[%s340 + $0x148] sm:$0xff]
        %v383 = vld [vmem:[%s340 + $0x150] sm:$0xff]
        %v384 = vld [vmem:[%s340 + $0x158] sm:$0xff]
        %v385 = vld [vmem:[%s340 + $0x160] sm:$0xff]
        %v386 = vld [vmem:[%s340 + $0x168] sm:$0xff]
        %v387 = vld [vmem:[%s340 + $0x170] sm:$0xff]
        %v388 = vld [vmem:[%s340 + $0x178] sm:$0xff]
        %v389 = vld [vmem:[%s340 + $0x180] sm:$0xff]
        %v390 = vld [vmem:[%s340 + $0x188] sm:$0xff]
        %v391 = vld [vmem:[%s340 + $0x190] sm:$0xff]
        %v392 = vld [vmem:[%s340 + $0x198] sm:$0xff]
        %v393 = vld [vmem:[%s340 + $0x1a0] sm:$0xff]
        %v394 = vld [vmem:[%s340 + $0x1a8] sm:$0xff]
        %v395 = vld [vmem:[%s340 + $0x1b0] sm:$0xff]
        %v396 = vld [vmem:[%s340 + $0x1b8] sm:$0xff]
        %v397 = vld [vmem:[%s340 + $0x1c0] sm:$0xff]
        %v398 = vld [vmem:[%s340 + $0x1c8] sm:$0xff]
        %v399 = vld [vmem:[%s340 + $0x1d0] sm:$0xff]
        %v400 = vld [vmem:[%s340 + $0x1d8] sm:$0xff]
        %v401 = vld [vmem:[%s340 + $0x1e0] sm:$0xff]
        %v402 = vld [vmem:[%s340 + $0x1e8] sm:$0xff]
        %v403 = vld [vmem:[%s340 + $0x1f0] sm:$0xff]
        %v404 = vld [vmem:[%s340 + $0x1f8] sm:$0xff]
        %v405 = vlaneseq
        %v406 = vand.u32 %v405, 127
        %vm407 = vcmp.lt.s32.totalorder %v406, 4
        %408 = vrot.lane.b32.xlu0 %v308, 4
        %v409 = vpop.permute.xlu0 %408
        %410 = vrot.lane.b32.xlu0 %v309, 4
        %v411 = vpop.permute.xlu0 %410
        %412 = vrot.lane.b32.xlu0 %v310, 4
        %v413 = vpop.permute.xlu0 %412
        %414 = vrot.lane.b32.xlu0 %v311, 4
        %v415 = vpop.permute.xlu0 %414
        %416 = vrot.lane.b32.xlu0 %v312, 4
        %v417 = vpop.permute.xlu0 %416
        %418 = vrot.lane.b32.xlu0 %v313, 4
        %v419 = vpop.permute.xlu0 %418
        %420 = vrot.lane.b32.xlu0 %v314, 4
        %v421 = vpop.permute.xlu0 %420
        %422 = vrot.lane.b32.xlu0 %v315, 4
        %v423 = vpop.permute.xlu0 %422
        %424 = vrot.lane.b32.xlu0 %v316, 4
        %v425 = vpop.permute.xlu0 %424
        %426 = vrot.lane.b32.xlu0 %v317, 4
        %v427 = vpop.permute.xlu0 %426
        %428 = vrot.lane.b32.xlu0 %v318, 4
        %v429 = vpop.permute.xlu0 %428
        %430 = vrot.lane.b32.xlu0 %v319, 4
        %v431 = vpop.permute.xlu0 %430
        %432 = vrot.lane.b32.xlu0 %v320, 4
        %v433 = vpop.permute.xlu0 %432
        %434 = vrot.lane.b32.xlu0 %v321, 4
        %v435 = vpop.permute.xlu0 %434
        %436 = vrot.lane.b32.xlu0 %v322, 4
        %v437 = vpop.permute.xlu0 %436
        %438 = vrot.lane.b32.xlu0 %v323, 4
        %v439 = vpop.permute.xlu0 %438
        %440 = vrot.lane.b32.xlu0 %v324, 4
        %v441 = vpop.permute.xlu0 %440
        %442 = vrot.lane.b32.xlu0 %v325, 4
        %v443 = vpop.permute.xlu0 %442
        %444 = vrot.lane.b32.xlu0 %v326, 4
        %v445 = vpop.permute.xlu0 %444
        %446 = vrot.lane.b32.xlu0 %v327, 4
        %v447 = vpop.permute.xlu0 %446
        %448 = vrot.lane.b32.xlu0 %v328, 4
        %v449 = vpop.permute.xlu0 %448
        %450 = vrot.lane.b32.xlu0 %v329, 4
        %v451 = vpop.permute.xlu0 %450
        %452 = vrot.lane.b32.xlu0 %v330, 4
        %v453 = vpop.permute.xlu0 %452
        %454 = vrot.lane.b32.xlu0 %v331, 4
        %v455 = vpop.permute.xlu0 %454
        %456 = vrot.lane.b32.xlu0 %v332, 4
        %v457 = vpop.permute.xlu0 %456
        %458 = vrot.lane.b32.xlu0 %v333, 4
        %v459 = vpop.permute.xlu0 %458
        %460 = vrot.lane.b32.xlu0 %v334, 4
        %v461 = vpop.permute.xlu0 %460
        %462 = vrot.lane.b32.xlu0 %v335, 4
        %v463 = vpop.permute.xlu0 %462
        %464 = vrot.lane.b32.xlu0 %v336, 4
        %v465 = vpop.permute.xlu0 %464
        %466 = vrot.lane.b32.xlu0 %v337, 4
        %v467 = vpop.permute.xlu0 %466
        %468 = vrot.lane.b32.xlu0 %v338, 4
        %v469 = vpop.permute.xlu0 %468
        %470 = vrot.lane.b32.xlu0 %v339, 4
        %v471 = vpop.permute.xlu0 %470
        %v472 = vsel %vm407, 0.0, %v409
        %v473 = vsel %vm407, 0.0, %v411
        %v474 = vsel %vm407, 0.0, %v413
        %v475 = vsel %vm407, 0.0, %v415
        %v476 = vsel %vm407, 0.0, %v417
        %v477 = vsel %vm407, 0.0, %v419
        %v478 = vsel %vm407, 0.0, %v421
        %v479 = vsel %vm407, 0.0, %v423
        %v480 = vsel %vm407, 0.0, %v425
        %v481 = vsel %vm407, 0.0, %v427
        %v482 = vsel %vm407, 0.0, %v429
        %v483 = vsel %vm407, 0.0, %v431
        %v484 = vsel %vm407, 0.0, %v433
        %v485 = vsel %vm407, 0.0, %v435
        %v486 = vsel %vm407, 0.0, %v437
        %v487 = vsel %vm407, 0.0, %v439
        %v488 = vsel %vm407, 0.0, %v441
        %v489 = vsel %vm407, 0.0, %v443
        %v490 = vsel %vm407, 0.0, %v445
        %v491 = vsel %vm407, 0.0, %v447
        %v492 = vsel %vm407, 0.0, %v449
        %v493 = vsel %vm407, 0.0, %v451
        %v494 = vsel %vm407, 0.0, %v453
        %v495 = vsel %vm407, 0.0, %v455
        %v496 = vsel %vm407, 0.0, %v457
        %v497 = vsel %vm407, 0.0, %v459
        %v498 = vsel %vm407, 0.0, %v461
        %v499 = vsel %vm407, 0.0, %v463
        %v500 = vsel %vm407, 0.0, %v465
        %v501 = vsel %vm407, 0.0, %v467
        %v502 = vsel %vm407, 0.0, %v469
        %v503 = vsel %vm407, 0.0, %v471
        %vm504 = vcmp.lt.s32.totalorder %v406, 2
        %505 = vrot.lane.b32.xlu0 %v308, 2
        %v506 = vpop.permute.xlu0 %505
        %507 = vrot.lane.b32.xlu0 %v309, 2
        %v508 = vpop.permute.xlu0 %507
        %509 = vrot.lane.b32.xlu0 %v310, 2
        %v510 = vpop.permute.xlu0 %509
        %511 = vrot.lane.b32.xlu0 %v311, 2
        %v512 = vpop.permute.xlu0 %511
        %513 = vrot.lane.b32.xlu0 %v312, 2
        %v514 = vpop.permute.xlu0 %513
        %515 = vrot.lane.b32.xlu0 %v313, 2
        %v516 = vpop.permute.xlu0 %515
        %517 = vrot.lane.b32.xlu0 %v314, 2
        %v518 = vpop.permute.xlu0 %517
        %519 = vrot.lane.b32.xlu0 %v315, 2
        %v520 = vpop.permute.xlu0 %519
        %521 = vrot.lane.b32.xlu0 %v316, 2
        %v522 = vpop.permute.xlu0 %521
        %523 = vrot.lane.b32.xlu0 %v317, 2
        %v524 = vpop.permute.xlu0 %523
        %525 = vrot.lane.b32.xlu0 %v318, 2
        %v526 = vpop.permute.xlu0 %525
        %527 = vrot.lane.b32.xlu0 %v319, 2
        %v528 = vpop.permute.xlu0 %527
        %529 = vrot.lane.b32.xlu0 %v320, 2
        %v530 = vpop.permute.xlu0 %529
        %531 = vrot.lane.b32.xlu0 %v321, 2
        %v532 = vpop.permute.xlu0 %531
        %533 = vrot.lane.b32.xlu0 %v322, 2
        %v534 = vpop.permute.xlu0 %533
        %535 = vrot.lane.b32.xlu0 %v323, 2
        %v536 = vpop.permute.xlu0 %535
        %537 = vrot.lane.b32.xlu0 %v324, 2
        %v538 = vpop.permute.xlu0 %537
        %539 = vrot.lane.b32.xlu0 %v325, 2
        %v540 = vpop.permute.xlu0 %539
        %541 = vrot.lane.b32.xlu0 %v326, 2
        %v542 = vpop.permute.xlu0 %541
        %543 = vrot.lane.b32.xlu0 %v327, 2
        %v544 = vpop.permute.xlu0 %543
        %545 = vrot.lane.b32.xlu0 %v328, 2
        %v546 = vpop.permute.xlu0 %545
        %547 = vrot.lane.b32.xlu0 %v329, 2
        %v548 = vpop.permute.xlu0 %547
        %549 = vrot.lane.b32.xlu0 %v330, 2
        %v550 = vpop.permute.xlu0 %549
        %551 = vrot.lane.b32.xlu0 %v331, 2
        %v552 = vpop.permute.xlu0 %551
        %553 = vrot.lane.b32.xlu0 %v332, 2
        %v554 = vpop.permute.xlu0 %553
        %555 = vrot.lane.b32.xlu0 %v333, 2
        %v556 = vpop.permute.xlu0 %555
        %557 = vrot.lane.b32.xlu0 %v334, 2
        %v558 = vpop.permute.xlu0 %557
        %559 = vrot.lane.b32.xlu0 %v335, 2
        %v560 = vpop.permute.xlu0 %559
        %561 = vrot.lane.b32.xlu0 %v336, 2
        %v562 = vpop.permute.xlu0 %561
        %563 = vrot.lane.b32.xlu0 %v337, 2
        %v564 = vpop.permute.xlu0 %563
        %565 = vrot.lane.b32.xlu0 %v338, 2
        %v566 = vpop.permute.xlu0 %565
        %567 = vrot.lane.b32.xlu0 %v339, 2
        %v568 = vpop.permute.xlu0 %567
        %v569 = vsel %vm504, 0.0, %v506
        %v570 = vsel %vm504, 0.0, %v508
        %v571 = vsel %vm504, 0.0, %v510
        %v572 = vsel %vm504, 0.0, %v512
        %v573 = vsel %vm504, 0.0, %v514
        %v574 = vsel %vm504, 0.0, %v516
        %v575 = vsel %vm504, 0.0, %v518
        %v576 = vsel %vm504, 0.0, %v520
        %v577 = vsel %vm504, 0.0, %v522
        %v578 = vsel %vm504, 0.0, %v524
        %v579 = vsel %vm504, 0.0, %v526
        %v580 = vsel %vm504, 0.0, %v528
        %v581 = vsel %vm504, 0.0, %v530
        %v582 = vsel %vm504, 0.0, %v532
        %v583 = vsel %vm504, 0.0, %v534
        %v584 = vsel %vm504, 0.0, %v536
        %v585 = vsel %vm504, 0.0, %v538
        %v586 = vsel %vm504, 0.0, %v540
        %v587 = vsel %vm504, 0.0, %v542
        %v588 = vsel %vm504, 0.0, %v544
        %v589 = vsel %vm504, 0.0, %v546
        %v590 = vsel %vm504, 0.0, %v548
        %v591 = vsel %vm504, 0.0, %v550
        %v592 = vsel %vm504, 0.0, %v552
        %v593 = vsel %vm504, 0.0, %v554
        %v594 = vsel %vm504, 0.0, %v556
        %v595 = vsel %vm504, 0.0, %v558
        %v596 = vsel %vm504, 0.0, %v560
        %v597 = vsel %vm504, 0.0, %v562
        %v598 = vsel %vm504, 0.0, %v564
        %v599 = vsel %vm504, 0.0, %v566
        %v600 = vsel %vm504, 0.0, %v568
        %v601 = vld [vmem:[#allocation7] sm:$0xff]
        %v602 = vld [vmem:[#allocation7 + $0x8] sm:$0xff]
        %v603 = vld [vmem:[#allocation7 + $0x10] sm:$0xff]
        %v604 = vld [vmem:[#allocation7 + $0x18] sm:$0xff]
        %v605 = vld [vmem:[#allocation7 + $0x20] sm:$0xff]
        %v606 = vld [vmem:[#allocation7 + $0x28] sm:$0xff]
        %v607 = vld [vmem:[#allocation7 + $0x30] sm:$0xff]
        %v608 = vld [vmem:[#allocation7 + $0x38] sm:$0xff]
        %v609 = vld [vmem:[#allocation7 + $0x40] sm:$0xff]
        %v610 = vld [vmem:[#allocation7 + $0x48] sm:$0xff]
        %v611 = vld [vmem:[#allocation7 + $0x50] sm:$0xff]
        %v612 = vld [vmem:[#allocation7 + $0x58] sm:$0xff]
        %v613 = vld [vmem:[#allocation7 + $0x60] sm:$0xff]
        %v614 = vld [vmem:[#allocation7 + $0x68] sm:$0xff]
        %v615 = vld [vmem:[#allocation7 + $0x70] sm:$0xff]
        %v616 = vld [vmem:[#allocation7 + $0x78] sm:$0xff]
        %v617 = vld [vmem:[#allocation7 + $0x80] sm:$0xff]
        %v618 = vld [vmem:[#allocation7 + $0x88] sm:$0xff]
        %v619 = vld [vmem:[#allocation7 + $0x90] sm:$0xff]
        %v620 = vld [vmem:[#allocation7 + $0x98] sm:$0xff]
        %v621 = vld [vmem:[#allocation7 + $0xa0] sm:$0xff]
        %v622 = vld [vmem:[#allocation7 + $0xa8] sm:$0xff]
        %v623 = vld [vmem:[#allocation7 + $0xb0] sm:$0xff]
        %v624 = vld [vmem:[#allocation7 + $0xb8] sm:$0xff]
        %v625 = vld [vmem:[#allocation7 + $0xc0] sm:$0xff]
        %v626 = vld [vmem:[#allocation7 + $0xc8] sm:$0xff]
        %v627 = vld [vmem:[#allocation7 + $0xd0] sm:$0xff]
        %v628 = vld [vmem:[#allocation7 + $0xd8] sm:$0xff]
        %v629 = vld [vmem:[#allocation7 + $0xe0] sm:$0xff]
        %v630 = vld [vmem:[#allocation7 + $0xe8] sm:$0xff]
        %v631 = vld [vmem:[#allocation7 + $0xf0] sm:$0xff]
        %v632 = vld [vmem:[#allocation7 + $0xf8] sm:$0xff]
        %v633 = vld [vmem:[#allocation7 + $0x100] sm:$0xff]
        %v634 = vld [vmem:[#allocation7 + $0x108] sm:$0xff]
        %v635 = vld [vmem:[#allocation7 + $0x110] sm:$0xff]
        %v636 = vld [vmem:[#allocation7 + $0x118] sm:$0xff]
        %v637 = vld [vmem:[#allocation7 + $0x120] sm:$0xff]
        %v638 = vld [vmem:[#allocation7 + $0x128] sm:$0xff]
        %v639 = vld [vmem:[#allocation7 + $0x130] sm:$0xff]
        %v640 = vld [vmem:[#allocation7 + $0x138] sm:$0xff]
        %v641 = vld [vmem:[#allocation7 + $0x140] sm:$0xff]
        %v642 = vld [vmem:[#allocation7 + $0x148] sm:$0xff]
        %v643 = vld [vmem:[#allocation7 + $0x150] sm:$0xff]
        %v644 = vld [vmem:[#allocation7 + $0x158] sm:$0xff]
        %v645 = vld [vmem:[#allocation7 + $0x160] sm:$0xff]
        %v646 = vld [vmem:[#allocation7 + $0x168] sm:$0xff]
        %v647 = vld [vmem:[#allocation7 + $0x170] sm:$0xff]
        %v648 = vld [vmem:[#allocation7 + $0x178] sm:$0xff]
        %v649 = vld [vmem:[#allocation7 + $0x180] sm:$0xff]
        %v650 = vld [vmem:[#allocation7 + $0x188] sm:$0xff]
        %v651 = vld [vmem:[#allocation7 + $0x190] sm:$0xff]
        %v652 = vld [vmem:[#allocation7 + $0x198] sm:$0xff]
        %v653 = vld [vmem:[#allocation7 + $0x1a0] sm:$0xff]
        %v654 = vld [vmem:[#allocation7 + $0x1a8] sm:$0xff]
        %v655 = vld [vmem:[#allocation7 + $0x1b0] sm:$0xff]
        %v656 = vld [vmem:[#allocation7 + $0x1b8] sm:$0xff]
        %v657 = vld [vmem:[#allocation7 + $0x1c0] sm:$0xff]
        %v658 = vld [vmem:[#allocation7 + $0x1c8] sm:$0xff]
        %v659 = vld [vmem:[#allocation7 + $0x1d0] sm:$0xff]
        %v660 = vld [vmem:[#allocation7 + $0x1d8] sm:$0xff]
        %v661 = vld [vmem:[#allocation7 + $0x1e0] sm:$0xff]
        %v662 = vld [vmem:[#allocation7 + $0x1e8] sm:$0xff]
        %v663 = vld [vmem:[#allocation7 + $0x1f0] sm:$0xff]
        %v664 = vld [vmem:[#allocation7 + $0x1f8] sm:$0xff]
        %665 = vmatpush.msra.mxu0 %v487
        %666 = vmatpush.msra.mxu0 %v486
        %667 = vmatpush.msra.mxu0 %v485
        %668 = vmatpush.msra.mxu0 %v484
        %669 = vmatpush.msra.mxu0 %v483
        %670 = vmatpush.msra.mxu0 %v482
        %671 = vmatpush.msra.mxu0 %v481
        %672 = vmatpush.msra.mxu0 %v480
        %673 = vmatpush.msra.mxu0 %v479
        %674 = vmatpush.msra.mxu0 %v478
        %675 = vmatpush.msra.mxu0 %v477
        %676 = vmatpush.msra.mxu0 %v476
        %677 = vmatpush.msra.mxu0 %v475
        %678 = vmatpush.msra.mxu0 %v474
        %679 = vmatpush.msra.mxu0 %v473
        %680 = vmatpush.msra.mxu0 %v472
        %681 = vmatmul.f32.gmra.mxu0 %v601
        %v682 = vpop.f32.mrf.mxu0
        %v683 = vadd.f32 0.0, %v682
        %684 = vmatmul.f32.gmra.mxu0 %v603
        %v685 = vpop.f32.mrf.mxu0
        %v686 = vadd.f32 0.0, %v685
        %687 = vmatmul.f32.gmra.mxu0 %v605
        %v688 = vpop.f32.mrf.mxu0
        %v689 = vadd.f32 0.0, %v688
        %690 = vmatmul.f32.gmra.mxu0 %v607
        %v691 = vpop.f32.mrf.mxu0
        %v692 = vadd.f32 0.0, %v691
        %693 = vmatmul.f32.gmra.mxu0 %v609
        %v694 = vpop.f32.mrf.mxu0
        %v695 = vadd.f32 0.0, %v694
        %696 = vmatmul.f32.gmra.mxu0 %v611
        %v697 = vpop.f32.mrf.mxu0
        %v698 = vadd.f32 0.0, %v697
        %699 = vmatmul.f32.gmra.mxu0 %v613
        %v700 = vpop.f32.mrf.mxu0
        %v701 = vadd.f32 0.0, %v700
        %702 = vmatmul.f32.gmra.mxu0 %v615
        %v703 = vpop.f32.mrf.mxu0
        %v704 = vadd.f32 0.0, %v703
        %705 = vmatmul.f32.gmra.mxu0 %v617
        %v706 = vpop.f32.mrf.mxu0
        %v707 = vadd.f32 0.0, %v706
        %708 = vmatmul.f32.gmra.mxu0 %v619
        %v709 = vpop.f32.mrf.mxu0
        %v710 = vadd.f32 0.0, %v709
        %711 = vmatmul.f32.gmra.mxu0 %v621
        %v712 = vpop.f32.mrf.mxu0
        %v713 = vadd.f32 0.0, %v712
        %714 = vmatmul.f32.gmra.mxu0 %v623
        %v715 = vpop.f32.mrf.mxu0
        %v716 = vadd.f32 0.0, %v715
        %717 = vmatmul.f32.gmra.mxu0 %v625
        %v718 = vpop.f32.mrf.mxu0
        %v719 = vadd.f32 0.0, %v718
        %720 = vmatmul.f32.gmra.mxu0 %v627
        %v721 = vpop.f32.mrf.mxu0
        %v722 = vadd.f32 0.0, %v721
        %723 = vmatmul.f32.gmra.mxu0 %v629
        %v724 = vpop.f32.mrf.mxu0
        %v725 = vadd.f32 0.0, %v724
        %726 = vmatmul.f32.gmra.mxu0 %v631
        %v727 = vpop.f32.mrf.mxu0
        %v728 = vadd.f32 0.0, %v727
        %729 = vmatmul.f32.gmra.mxu0 %v633
        %v730 = vpop.f32.mrf.mxu0
        %v731 = vadd.f32 0.0, %v730
        %732 = vmatmul.f32.gmra.mxu0 %v635
        %v733 = vpop.f32.mrf.mxu0
        %v734 = vadd.f32 0.0, %v733
        %735 = vmatmul.f32.gmra.mxu0 %v637
        %v736 = vpop.f32.mrf.mxu0
        %v737 = vadd.f32 0.0, %v736
        %738 = vmatmul.f32.gmra.mxu0 %v639
        %v739 = vpop.f32.mrf.mxu0
        %v740 = vadd.f32 0.0, %v739
        %741 = vmatmul.f32.gmra.mxu0 %v641
        %v742 = vpop.f32.mrf.mxu0
        %v743 = vadd.f32 0.0, %v742
        %744 = vmatmul.f32.gmra.mxu0 %v643
        %v745 = vpop.f32.mrf.mxu0
        %v746 = vadd.f32 0.0, %v745
        %747 = vmatmul.f32.gmra.mxu0 %v645
        %v748 = vpop.f32.mrf.mxu0
        %v749 = vadd.f32 0.0, %v748
        %750 = vmatmul.f32.gmra.mxu0 %v647
        %v751 = vpop.f32.mrf.mxu0
        %v752 = vadd.f32 0.0, %v751
        %753 = vmatmul.f32.gmra.mxu0 %v649
        %v754 = vpop.f32.mrf.mxu0
        %v755 = vadd.f32 0.0, %v754
        %756 = vmatmul.f32.gmra.mxu0 %v651
        %v757 = vpop.f32.mrf.mxu0
        %v758 = vadd.f32 0.0, %v757
        %759 = vmatmul.f32.gmra.mxu0 %v653
        %v760 = vpop.f32.mrf.mxu0
        %v761 = vadd.f32 0.0, %v760
        %762 = vmatmul.f32.gmra.mxu0 %v655
        %v763 = vpop.f32.mrf.mxu0
        %v764 = vadd.f32 0.0, %v763
        %765 = vmatmul.f32.gmra.mxu0 %v657
        %v766 = vpop.f32.mrf.mxu0
        %v767 = vadd.f32 0.0, %v766
        %768 = vmatmul.f32.gmra.mxu0 %v659
        %v769 = vpop.f32.mrf.mxu0
        %v770 = vadd.f32 0.0, %v769
        %771 = vmatmul.f32.gmra.mxu0 %v661
        %v772 = vpop.f32.mrf.mxu0
        %v773 = vadd.f32 0.0, %v772
        %774 = vmatmul.f32.gmra.mxu0 %v663
        %v775 = vpop.f32.mrf.mxu0
        %v776 = vadd.f32 0.0, %v775
        %777 = vdwg.mxu0
        %778 = vmatpush.msra.mxu0 %v503
        %779 = vmatpush.msra.mxu0 %v502
        %780 = vmatpush.msra.mxu0 %v501
        %781 = vmatpush.msra.mxu0 %v500
        %782 = vmatpush.msra.mxu0 %v499
        %783 = vmatpush.msra.mxu0 %v498
        %784 = vmatpush.msra.mxu0 %v497
        %785 = vmatpush.msra.mxu0 %v496
        %786 = vmatpush.msra.mxu0 %v495
        %787 = vmatpush.msra.mxu0 %v494
        %788 = vmatpush.msra.mxu0 %v493
        %789 = vmatpush.msra.mxu0 %v492
        %790 = vmatpush.msra.mxu0 %v491
        %791 = vmatpush.msra.mxu0 %v490
        %792 = vmatpush.msra.mxu0 %v489
        %793 = vmatpush.msra.mxu0 %v488
        %794 = vmatmul.f32.gmra.mxu0 %v602
        %v795 = vpop.f32.mrf.mxu0
        %v796 = vadd.f32 %v683, %v795
        %797 = vmatmul.f32.gmra.mxu0 %v604
        %v798 = vpop.f32.mrf.mxu0
        %v799 = vadd.f32 %v686, %v798
        %800 = vmatmul.f32.gmra.mxu0 %v606
        %v801 = vpop.f32.mrf.mxu0
        %v802 = vadd.f32 %v689, %v801
        %803 = vmatmul.f32.gmra.mxu0 %v608
        %v804 = vpop.f32.mrf.mxu0
        %v805 = vadd.f32 %v692, %v804
        %806 = vmatmul.f32.gmra.mxu0 %v610
        %v807 = vpop.f32.mrf.mxu0
        %v808 = vadd.f32 %v695, %v807
        %809 = vmatmul.f32.gmra.mxu0 %v612
        %v810 = vpop.f32.mrf.mxu0
        %v811 = vadd.f32 %v698, %v810
        %812 = vmatmul.f32.gmra.mxu0 %v614
        %v813 = vpop.f32.mrf.mxu0
        %v814 = vadd.f32 %v701, %v813
        %815 = vmatmul.f32.gmra.mxu0 %v616
        %v816 = vpop.f32.mrf.mxu0
        %v817 = vadd.f32 %v704, %v816
        %818 = vmatmul.f32.gmra.mxu0 %v618
        %v819 = vpop.f32.mrf.mxu0
        %v820 = vadd.f32 %v707, %v819
        %821 = vmatmul.f32.gmra.mxu0 %v620
        %v822 = vpop.f32.mrf.mxu0
        %v823 = vadd.f32 %v710, %v822
        %824 = vmatmul.f32.gmra.mxu0 %v622
        %v825 = vpop.f32.mrf.mxu0
        %v826 = vadd.f32 %v713, %v825
        %827 = vmatmul.f32.gmra.mxu0 %v624
        %v828 = vpop.f32.mrf.mxu0
        %v829 = vadd.f32 %v716, %v828
        %830 = vmatmul.f32.gmra.mxu0 %v626
        %v831 = vpop.f32.mrf.mxu0
        %v832 = vadd.f32 %v719, %v831
        %833 = vmatmul.f32.gmra.mxu0 %v628
        %v834 = vpop.f32.mrf.mxu0
        %v835 = vadd.f32 %v722, %v834
        %836 = vmatmul.f32.gmra.mxu0 %v630
        %v837 = vpop.f32.mrf.mxu0
        %v838 = vadd.f32 %v725, %v837
        %839 = vmatmul.f32.gmra.mxu0 %v632
        %v840 = vpop.f32.mrf.mxu0
        %v841 = vadd.f32 %v728, %v840
        %842 = vmatmul.f32.gmra.mxu0 %v634
        %v843 = vpop.f32.mrf.mxu0
        %v844 = vadd.f32 %v731, %v843
        %845 = vmatmul.f32.gmra.mxu0 %v636
        %v846 = vpop.f32.mrf.mxu0
        %v847 = vadd.f32 %v734, %v846
        %848 = vmatmul.f32.gmra.mxu0 %v638
        %v849 = vpop.f32.mrf.mxu0
        %v850 = vadd.f32 %v737, %v849
        %851 = vmatmul.f32.gmra.mxu0 %v640
        %v852 = vpop.f32.mrf.mxu0
        %v853 = vadd.f32 %v740, %v852
        %854 = vmatmul.f32.gmra.mxu0 %v642
        %v855 = vpop.f32.mrf.mxu0
        %v856 = vadd.f32 %v743, %v855
        %857 = vmatmul.f32.gmra.mxu0 %v644
        %v858 = vpop.f32.mrf.mxu0
        %v859 = vadd.f32 %v746, %v858
        %860 = vmatmul.f32.gmra.mxu0 %v646
        %v861 = vpop.f32.mrf.mxu0
        %v862 = vadd.f32 %v749, %v861
        %863 = vmatmul.f32.gmra.mxu0 %v648
        %v864 = vpop.f32.mrf.mxu0
        %v865 = vadd.f32 %v752, %v864
        %866 = vmatmul.f32.gmra.mxu0 %v650
        %v867 = vpop.f32.mrf.mxu0
        %v868 = vadd.f32 %v755, %v867
        %869 = vmatmul.f32.gmra.mxu0 %v652
        %v870 = vpop.f32.mrf.mxu0
        %v871 = vadd.f32 %v758, %v870
        %872 = vmatmul.f32.gmra.mxu0 %v654
        %v873 = vpop.f32.mrf.mxu0
        %v874 = vadd.f32 %v761, %v873
        %875 = vmatmul.f32.gmra.mxu0 %v656
        %v876 = vpop.f32.mrf.mxu0
        %v877 = vadd.f32 %v764, %v876
        %878 = vmatmul.f32.gmra.mxu0 %v658
        %v879 = vpop.f32.mrf.mxu0
        %v880 = vadd.f32 %v767, %v879
        %881 = vmatmul.f32.gmra.mxu0 %v660
        %v882 = vpop.f32.mrf.mxu0
        %v883 = vadd.f32 %v770, %v882
        %884 = vmatmul.f32.gmra.mxu0 %v662
        %v885 = vpop.f32.mrf.mxu0
        %v886 = vadd.f32 %v773, %v885
        %887 = vmatmul.f32.gmra.mxu0 %v664
        %v888 = vpop.f32.mrf.mxu0
        %v889 = vadd.f32 %v776, %v888
        %890 = vdwg.mxu0
        %891 = vmatpush.msra.mxu0 %v323
        %892 = vmatpush.msra.mxu0 %v322
        %893 = vmatpush.msra.mxu0 %v321
        %894 = vmatpush.msra.mxu0 %v320
        %895 = vmatpush.msra.mxu0 %v319
        %896 = vmatpush.msra.mxu0 %v318
        %897 = vmatpush.msra.mxu0 %v317
        %898 = vmatpush.msra.mxu0 %v316
        %899 = vmatpush.msra.mxu0 %v315
        %900 = vmatpush.msra.mxu0 %v314
        %901 = vmatpush.msra.mxu0 %v313
        %902 = vmatpush.msra.mxu0 %v312
        %903 = vmatpush.msra.mxu0 %v311
        %904 = vmatpush.msra.mxu0 %v310
        %905 = vmatpush.msra.mxu0 %v309
        %906 = vmatpush.msra.mxu0 %v308
        %907 = vmatmul.f32.gmra.mxu0 %v341
        %v908 = vpop.f32.mrf.mxu0
        %v909 = vadd.f32 %v796, %v908
        %910 = vmatmul.f32.gmra.mxu0 %v343
        %v911 = vpop.f32.mrf.mxu0
        %v912 = vadd.f32 %v799, %v911
        %913 = vmatmul.f32.gmra.mxu0 %v345
        %v914 = vpop.f32.mrf.mxu0
        %v915 = vadd.f32 %v802, %v914
        %916 = vmatmul.f32.gmra.mxu0 %v347
        %v917 = vpop.f32.mrf.mxu0
        %v918 = vadd.f32 %v805, %v917
        %919 = vmatmul.f32.gmra.mxu0 %v349
        %v920 = vpop.f32.mrf.mxu0
        %v921 = vadd.f32 %v808, %v920
        %922 = vmatmul.f32.gmra.mxu0 %v351
        %v923 = vpop.f32.mrf.mxu0
        %v924 = vadd.f32 %v811, %v923
        %925 = vmatmul.f32.gmra.mxu0 %v353
        %v926 = vpop.f32.mrf.mxu0
        %v927 = vadd.f32 %v814, %v926
        %928 = vmatmul.f32.gmra.mxu0 %v355
        %v929 = vpop.f32.mrf.mxu0
        %v930 = vadd.f32 %v817, %v929
        %931 = vmatmul.f32.gmra.mxu0 %v357
        %v932 = vpop.f32.mrf.mxu0
        %v933 = vadd.f32 %v820, %v932
        %934 = vmatmul.f32.gmra.mxu0 %v359
        %v935 = vpop.f32.mrf.mxu0
        %v936 = vadd.f32 %v823, %v935
        %937 = vmatmul.f32.gmra.mxu0 %v361
        %v938 = vpop.f32.mrf.mxu0
        %v939 = vadd.f32 %v826, %v938
        %940 = vmatmul.f32.gmra.mxu0 %v363
        %v941 = vpop.f32.mrf.mxu0
        %v942 = vadd.f32 %v829, %v941
        %943 = vmatmul.f32.gmra.mxu0 %v365
        %v944 = vpop.f32.mrf.mxu0
        %v945 = vadd.f32 %v832, %v944
        %946 = vmatmul.f32.gmra.mxu0 %v367
        %v947 = vpop.f32.mrf.mxu0
        %v948 = vadd.f32 %v835, %v947
        %949 = vmatmul.f32.gmra.mxu0 %v369
        %v950 = vpop.f32.mrf.mxu0
        %v951 = vadd.f32 %v838, %v950
        %952 = vmatmul.f32.gmra.mxu0 %v371
        %v953 = vpop.f32.mrf.mxu0
        %v954 = vadd.f32 %v841, %v953
        %955 = vmatmul.f32.gmra.mxu0 %v373
        %v956 = vpop.f32.mrf.mxu0
        %v957 = vadd.f32 %v844, %v956
        %958 = vmatmul.f32.gmra.mxu0 %v375
        %v959 = vpop.f32.mrf.mxu0
        %v960 = vadd.f32 %v847, %v959
        %961 = vmatmul.f32.gmra.mxu0 %v377
        %v962 = vpop.f32.mrf.mxu0
        %v963 = vadd.f32 %v850, %v962
        %964 = vmatmul.f32.gmra.mxu0 %v379
        %v965 = vpop.f32.mrf.mxu0
        %v966 = vadd.f32 %v853, %v965
        %967 = vmatmul.f32.gmra.mxu0 %v381
        %v968 = vpop.f32.mrf.mxu0
        %v969 = vadd.f32 %v856, %v968
        %970 = vmatmul.f32.gmra.mxu0 %v383
        %v971 = vpop.f32.mrf.mxu0
        %v972 = vadd.f32 %v859, %v971
        %973 = vmatmul.f32.gmra.mxu0 %v385
        %v974 = vpop.f32.mrf.mxu0
        %v975 = vadd.f32 %v862, %v974
        %976 = vmatmul.f32.gmra.mxu0 %v387
        %v977 = vpop.f32.mrf.mxu0
        %v978 = vadd.f32 %v865, %v977
        %979 = vmatmul.f32.gmra.mxu0 %v389
        %v980 = vpop.f32.mrf.mxu0
        %v981 = vadd.f32 %v868, %v980
        %982 = vmatmul.f32.gmra.mxu0 %v391
        %v983 = vpop.f32.mrf.mxu0
        %v984 = vadd.f32 %v871, %v983
        %985 = vmatmul.f32.gmra.mxu0 %v393
        %v986 = vpop.f32.mrf.mxu0
        %v987 = vadd.f32 %v874, %v986
        %988 = vmatmul.f32.gmra.mxu0 %v395
        %v989 = vpop.f32.mrf.mxu0
        %v990 = vadd.f32 %v877, %v989
        %991 = vmatmul.f32.gmra.mxu0 %v397
        %v992 = vpop.f32.mrf.mxu0
        %v993 = vadd.f32 %v880, %v992
        %994 = vmatmul.f32.gmra.mxu0 %v399
        %v995 = vpop.f32.mrf.mxu0
        %v996 = vadd.f32 %v883, %v995
        %997 = vmatmul.f32.gmra.mxu0 %v401
        %v998 = vpop.f32.mrf.mxu0
        %v999 = vadd.f32 %v886, %v998
        %1000 = vmatmul.f32.gmra.mxu0 %v403
        %v1001 = vpop.f32.mrf.mxu0
        %v1002 = vadd.f32 %v889, %v1001
        %1003 = vdwg.mxu0
        %1004 = vmatpush.msra.mxu0 %v339
        %1005 = vmatpush.msra.mxu0 %v338
        %1006 = vmatpush.msra.mxu0 %v337
        %1007 = vmatpush.msra.mxu0 %v336
        %1008 = vmatpush.msra.mxu0 %v335
        %1009 = vmatpush.msra.mxu0 %v334
        %1010 = vmatpush.msra.mxu0 %v333
        %1011 = vmatpush.msra.mxu0 %v332
        %1012 = vmatpush.msra.mxu0 %v331
        %1013 = vmatpush.msra.mxu0 %v330
        %1014 = vmatpush.msra.mxu0 %v329
        %1015 = vmatpush.msra.mxu0 %v328
        %1016 = vmatpush.msra.mxu0 %v327
        %1017 = vmatpush.msra.mxu0 %v326
        %1018 = vmatpush.msra.mxu0 %v325
        %1019 = vmatpush.msra.mxu0 %v324
        %1020 = vmatmul.f32.gmra.mxu0 %v342
        %v1021 = vpop.f32.mrf.mxu0
        %v1022 = vadd.f32 %v909, %v1021
        %1023 = vmatmul.f32.gmra.mxu0 %v344
        %v1024 = vpop.f32.mrf.mxu0
        %v1025 = vadd.f32 %v912, %v1024
        %1026 = vmatmul.f32.gmra.mxu0 %v346
        %v1027 = vpop.f32.mrf.mxu0
        %v1028 = vadd.f32 %v915, %v1027
        %1029 = vmatmul.f32.gmra.mxu0 %v348
        %v1030 = vpop.f32.mrf.mxu0
        %v1031 = vadd.f32 %v918, %v1030
        %1032 = vmatmul.f32.gmra.mxu0 %v350
        %v1033 = vpop.f32.mrf.mxu0
        %v1034 = vadd.f32 %v921, %v1033
        %1035 = vmatmul.f32.gmra.mxu0 %v352
        %v1036 = vpop.f32.mrf.mxu0
        %v1037 = vadd.f32 %v924, %v1036
        %1038 = vmatmul.f32.gmra.mxu0 %v354
        %v1039 = vpop.f32.mrf.mxu0
        %v1040 = vadd.f32 %v927, %v1039
        %1041 = vmatmul.f32.gmra.mxu0 %v356
        %v1042 = vpop.f32.mrf.mxu0
        %v1043 = vadd.f32 %v930, %v1042
        %1044 = vmatmul.f32.gmra.mxu0 %v358
        %v1045 = vpop.f32.mrf.mxu0
        %v1046 = vadd.f32 %v933, %v1045
        %1047 = vmatmul.f32.gmra.mxu0 %v360
        %v1048 = vpop.f32.mrf.mxu0
        %v1049 = vadd.f32 %v936, %v1048
        %1050 = vmatmul.f32.gmra.mxu0 %v362
        %v1051 = vpop.f32.mrf.mxu0
        %v1052 = vadd.f32 %v939, %v1051
        %1053 = vmatmul.f32.gmra.mxu0 %v364
        %v1054 = vpop.f32.mrf.mxu0
        %v1055 = vadd.f32 %v942, %v1054
        %1056 = vmatmul.f32.gmra.mxu0 %v366
        %v1057 = vpop.f32.mrf.mxu0
        %v1058 = vadd.f32 %v945, %v1057
        %1059 = vmatmul.f32.gmra.mxu0 %v368
        %v1060 = vpop.f32.mrf.mxu0
        %v1061 = vadd.f32 %v948, %v1060
        %1062 = vmatmul.f32.gmra.mxu0 %v370
        %v1063 = vpop.f32.mrf.mxu0
        %v1064 = vadd.f32 %v951, %v1063
        %1065 = vmatmul.f32.gmra.mxu0 %v372
        %v1066 = vpop.f32.mrf.mxu0
        %v1067 = vadd.f32 %v954, %v1066
        %1068 = vmatmul.f32.gmra.mxu0 %v374
        %v1069 = vpop.f32.mrf.mxu0
        %v1070 = vadd.f32 %v957, %v1069
        %1071 = vmatmul.f32.gmra.mxu0 %v376
        %v1072 = vpop.f32.mrf.mxu0
        %v1073 = vadd.f32 %v960, %v1072
        %1074 = vmatmul.f32.gmra.mxu0 %v378
        %v1075 = vpop.f32.mrf.mxu0
        %v1076 = vadd.f32 %v963, %v1075
        %1077 = vmatmul.f32.gmra.mxu0 %v380
        %v1078 = vpop.f32.mrf.mxu0
        %v1079 = vadd.f32 %v966, %v1078
        %1080 = vmatmul.f32.gmra.mxu0 %v382
        %v1081 = vpop.f32.mrf.mxu0
        %v1082 = vadd.f32 %v969, %v1081
        %1083 = vmatmul.f32.gmra.mxu0 %v384
        %v1084 = vpop.f32.mrf.mxu0
        %v1085 = vadd.f32 %v972, %v1084
        %1086 = vmatmul.f32.gmra.mxu0 %v386
        %v1087 = vpop.f32.mrf.mxu0
        %v1088 = vadd.f32 %v975, %v1087
        %1089 = vmatmul.f32.gmra.mxu0 %v388
        %v1090 = vpop.f32.mrf.mxu0
        %v1091 = vadd.f32 %v978, %v1090
        %1092 = vmatmul.f32.gmra.mxu0 %v390
        %v1093 = vpop.f32.mrf.mxu0
        %v1094 = vadd.f32 %v981, %v1093
        %1095 = vmatmul.f32.gmra.mxu0 %v392
        %v1096 = vpop.f32.mrf.mxu0
        %v1097 = vadd.f32 %v984, %v1096
        %1098 = vmatmul.f32.gmra.mxu0 %v394
        %v1099 = vpop.f32.mrf.mxu0
        %v1100 = vadd.f32 %v987, %v1099
        %1101 = vmatmul.f32.gmra.mxu0 %v396
        %v1102 = vpop.f32.mrf.mxu0
        %v1103 = vadd.f32 %v990, %v1102
        %1104 = vmatmul.f32.gmra.mxu0 %v398
        %v1105 = vpop.f32.mrf.mxu0
        %v1106 = vadd.f32 %v993, %v1105
        %1107 = vmatmul.f32.gmra.mxu0 %v400
        %v1108 = vpop.f32.mrf.mxu0
        %v1109 = vadd.f32 %v996, %v1108
        %1110 = vmatmul.f32.gmra.mxu0 %v402
        %v1111 = vpop.f32.mrf.mxu0
        %v1112 = vadd.f32 %v999, %v1111
        %1113 = vmatmul.f32.gmra.mxu0 %v404
        %v1114 = vpop.f32.mrf.mxu0
        %v1115 = vadd.f32 %v1002, %v1114
        %1116 = vdwg.mxu0
        %s1117 = scalar_lea.vmem [#allocation7], 512
        %v1118 = vld [vmem:[%s1117] sm:$0xff]
        %v1119 = vld [vmem:[%s1117 + $0x8] sm:$0xff]
        %v1120 = vld [vmem:[%s1117 + $0x10] sm:$0xff]
        %v1121 = vld [vmem:[%s1117 + $0x18] sm:$0xff]
        %v1122 = vld [vmem:[%s1117 + $0x20] sm:$0xff]
        %v1123 = vld [vmem:[%s1117 + $0x28] sm:$0xff]
        %v1124 = vld [vmem:[%s1117 + $0x30] sm:$0xff]
        %v1125 = vld [vmem:[%s1117 + $0x38] sm:$0xff]
        %v1126 = vld [vmem:[%s1117 + $0x40] sm:$0xff]
        %v1127 = vld [vmem:[%s1117 + $0x48] sm:$0xff]
        %v1128 = vld [vmem:[%s1117 + $0x50] sm:$0xff]
        %v1129 = vld [vmem:[%s1117 + $0x58] sm:$0xff]
        %v1130 = vld [vmem:[%s1117 + $0x60] sm:$0xff]
        %v1131 = vld [vmem:[%s1117 + $0x68] sm:$0xff]
        %v1132 = vld [vmem:[%s1117 + $0x70] sm:$0xff]
        %v1133 = vld [vmem:[%s1117 + $0x78] sm:$0xff]
        %v1134 = vld [vmem:[%s1117 + $0x80] sm:$0xff]
        %v1135 = vld [vmem:[%s1117 + $0x88] sm:$0xff]
        %v1136 = vld [vmem:[%s1117 + $0x90] sm:$0xff]
        %v1137 = vld [vmem:[%s1117 + $0x98] sm:$0xff]
        %v1138 = vld [vmem:[%s1117 + $0xa0] sm:$0xff]
        %v1139 = vld [vmem:[%s1117 + $0xa8] sm:$0xff]
        %v1140 = vld [vmem:[%s1117 + $0xb0] sm:$0xff]
        %v1141 = vld [vmem:[%s1117 + $0xb8] sm:$0xff]
        %v1142 = vld [vmem:[%s1117 + $0xc0] sm:$0xff]
        %v1143 = vld [vmem:[%s1117 + $0xc8] sm:$0xff]
        %v1144 = vld [vmem:[%s1117 + $0xd0] sm:$0xff]
        %v1145 = vld [vmem:[%s1117 + $0xd8] sm:$0xff]
        %v1146 = vld [vmem:[%s1117 + $0xe0] sm:$0xff]
        %v1147 = vld [vmem:[%s1117 + $0xe8] sm:$0xff]
        %v1148 = vld [vmem:[%s1117 + $0xf0] sm:$0xff]
        %v1149 = vld [vmem:[%s1117 + $0xf8] sm:$0xff]
        %v1150 = vld [vmem:[%s1117 + $0x100] sm:$0xff]
        %v1151 = vld [vmem:[%s1117 + $0x108] sm:$0xff]
        %v1152 = vld [vmem:[%s1117 + $0x110] sm:$0xff]
        %v1153 = vld [vmem:[%s1117 + $0x118] sm:$0xff]
        %v1154 = vld [vmem:[%s1117 + $0x120] sm:$0xff]
        %v1155 = vld [vmem:[%s1117 + $0x128] sm:$0xff]
        %v1156 = vld [vmem:[%s1117 + $0x130] sm:$0xff]
        %v1157 = vld [vmem:[%s1117 + $0x138] sm:$0xff]
        %v1158 = vld [vmem:[%s1117 + $0x140] sm:$0xff]
        %v1159 = vld [vmem:[%s1117 + $0x148] sm:$0xff]
        %v1160 = vld [vmem:[%s1117 + $0x150] sm:$0xff]
        %v1161 = vld [vmem:[%s1117 + $0x158] sm:$0xff]
        %v1162 = vld [vmem:[%s1117 + $0x160] sm:$0xff]
        %v1163 = vld [vmem:[%s1117 + $0x168] sm:$0xff]
        %v1164 = vld [vmem:[%s1117 + $0x170] sm:$0xff]
        %v1165 = vld [vmem:[%s1117 + $0x178] sm:$0xff]
        %v1166 = vld [vmem:[%s1117 + $0x180] sm:$0xff]
        %v1167 = vld [vmem:[%s1117 + $0x188] sm:$0xff]
        %v1168 = vld [vmem:[%s1117 + $0x190] sm:$0xff]
        %v1169 = vld [vmem:[%s1117 + $0x198] sm:$0xff]
        %v1170 = vld [vmem:[%s1117 + $0x1a0] sm:$0xff]
        %v1171 = vld [vmem:[%s1117 + $0x1a8] sm:$0xff]
        %v1172 = vld [vmem:[%s1117 + $0x1b0] sm:$0xff]
        %v1173 = vld [vmem:[%s1117 + $0x1b8] sm:$0xff]
        %v1174 = vld [vmem:[%s1117 + $0x1c0] sm:$0xff]
        %v1175 = vld [vmem:[%s1117 + $0x1c8] sm:$0xff]
        %v1176 = vld [vmem:[%s1117 + $0x1d0] sm:$0xff]
        %v1177 = vld [vmem:[%s1117 + $0x1d8] sm:$0xff]
        %v1178 = vld [vmem:[%s1117 + $0x1e0] sm:$0xff]
        %v1179 = vld [vmem:[%s1117 + $0x1e8] sm:$0xff]
        %v1180 = vld [vmem:[%s1117 + $0x1f0] sm:$0xff]
        %v1181 = vld [vmem:[%s1117 + $0x1f8] sm:$0xff]
        %1182 = vmatpush.msra.mxu0 %v584
        %1183 = vmatpush.msra.mxu0 %v583
        %1184 = vmatpush.msra.mxu0 %v582
        %1185 = vmatpush.msra.mxu0 %v581
        %1186 = vmatpush.msra.mxu0 %v580
        %1187 = vmatpush.msra.mxu0 %v579
        %1188 = vmatpush.msra.mxu0 %v578
        %1189 = vmatpush.msra.mxu0 %v577
        %1190 = vmatpush.msra.mxu0 %v576
        %1191 = vmatpush.msra.mxu0 %v575
        %1192 = vmatpush.msra.mxu0 %v574
        %1193 = vmatpush.msra.mxu0 %v573
        %1194 = vmatpush.msra.mxu0 %v572
        %1195 = vmatpush.msra.mxu0 %v571
        %1196 = vmatpush.msra.mxu0 %v570
        %1197 = vmatpush.msra.mxu0 %v569
        %1198 = vmatmul.f32.gmra.mxu0 %v1118
        %v1199 = vpop.f32.mrf.mxu0
        %v1200 = vadd.f32 0.0, %v1199
        %1201 = vmatmul.f32.gmra.mxu0 %v1120
        %v1202 = vpop.f32.mrf.mxu0
        %v1203 = vadd.f32 0.0, %v1202
        %1204 = vmatmul.f32.gmra.mxu0 %v1122
        %v1205 = vpop.f32.mrf.mxu0
        %v1206 = vadd.f32 0.0, %v1205
        %1207 = vmatmul.f32.gmra.mxu0 %v1124
        %v1208 = vpop.f32.mrf.mxu0
        %v1209 = vadd.f32 0.0, %v1208
        %1210 = vmatmul.f32.gmra.mxu0 %v1126
        %v1211 = vpop.f32.mrf.mxu0
        %v1212 = vadd.f32 0.0, %v1211
        %1213 = vmatmul.f32.gmra.mxu0 %v1128
        %v1214 = vpop.f32.mrf.mxu0
        %v1215 = vadd.f32 0.0, %v1214
        %1216 = vmatmul.f32.gmra.mxu0 %v1130
        %v1217 = vpop.f32.mrf.mxu0
        %v1218 = vadd.f32 0.0, %v1217
        %1219 = vmatmul.f32.gmra.mxu0 %v1132
        %v1220 = vpop.f32.mrf.mxu0
        %v1221 = vadd.f32 0.0, %v1220
        %1222 = vmatmul.f32.gmra.mxu0 %v1134
        %v1223 = vpop.f32.mrf.mxu0
        %v1224 = vadd.f32 0.0, %v1223
        %1225 = vmatmul.f32.gmra.mxu0 %v1136
        %v1226 = vpop.f32.mrf.mxu0
        %v1227 = vadd.f32 0.0, %v1226
        %1228 = vmatmul.f32.gmra.mxu0 %v1138
        %v1229 = vpop.f32.mrf.mxu0
        %v1230 = vadd.f32 0.0, %v1229
        %1231 = vmatmul.f32.gmra.mxu0 %v1140
        %v1232 = vpop.f32.mrf.mxu0
        %v1233 = vadd.f32 0.0, %v1232
        %1234 = vmatmul.f32.gmra.mxu0 %v1142
        %v1235 = vpop.f32.mrf.mxu0
        %v1236 = vadd.f32 0.0, %v1235
        %1237 = vmatmul.f32.gmra.mxu0 %v1144
        %v1238 = vpop.f32.mrf.mxu0
        %v1239 = vadd.f32 0.0, %v1238
        %1240 = vmatmul.f32.gmra.mxu0 %v1146
        %v1241 = vpop.f32.mrf.mxu0
        %v1242 = vadd.f32 0.0, %v1241
        %1243 = vmatmul.f32.gmra.mxu0 %v1148
        %v1244 = vpop.f32.mrf.mxu0
        %v1245 = vadd.f32 0.0, %v1244
        %1246 = vmatmul.f32.gmra.mxu0 %v1150
        %v1247 = vpop.f32.mrf.mxu0
        %v1248 = vadd.f32 0.0, %v1247
        %1249 = vmatmul.f32.gmra.mxu0 %v1152
        %v1250 = vpop.f32.mrf.mxu0
        %v1251 = vadd.f32 0.0, %v1250
        %1252 = vmatmul.f32.gmra.mxu0 %v1154
        %v1253 = vpop.f32.mrf.mxu0
        %v1254 = vadd.f32 0.0, %v1253
        %1255 = vmatmul.f32.gmra.mxu0 %v1156
        %v1256 = vpop.f32.mrf.mxu0
        %v1257 = vadd.f32 0.0, %v1256
        %1258 = vmatmul.f32.gmra.mxu0 %v1158
        %v1259 = vpop.f32.mrf.mxu0
        %v1260 = vadd.f32 0.0, %v1259
        %1261 = vmatmul.f32.gmra.mxu0 %v1160
        %v1262 = vpop.f32.mrf.mxu0
        %v1263 = vadd.f32 0.0, %v1262
        %1264 = vmatmul.f32.gmra.mxu0 %v1162
        %v1265 = vpop.f32.mrf.mxu0
        %v1266 = vadd.f32 0.0, %v1265
        %1267 = vmatmul.f32.gmra.mxu0 %v1164
        %v1268 = vpop.f32.mrf.mxu0
        %v1269 = vadd.f32 0.0, %v1268
        %1270 = vmatmul.f32.gmra.mxu0 %v1166
        %v1271 = vpop.f32.mrf.mxu0
        %v1272 = vadd.f32 0.0, %v1271
        %1273 = vmatmul.f32.gmra.mxu0 %v1168
        %v1274 = vpop.f32.mrf.mxu0
        %v1275 = vadd.f32 0.0, %v1274
        %1276 = vmatmul.f32.gmra.mxu0 %v1170
        %v1277 = vpop.f32.mrf.mxu0
        %v1278 = vadd.f32 0.0, %v1277
        %1279 = vmatmul.f32.gmra.mxu0 %v1172
        %v1280 = vpop.f32.mrf.mxu0
        %v1281 = vadd.f32 0.0, %v1280
        %1282 = vmatmul.f32.gmra.mxu0 %v1174
        %v1283 = vpop.f32.mrf.mxu0
        %v1284 = vadd.f32 0.0, %v1283
        %1285 = vmatmul.f32.gmra.mxu0 %v1176
        %v1286 = vpop.f32.mrf.mxu0
        %v1287 = vadd.f32 0.0, %v1286
        %1288 = vmatmul.f32.gmra.mxu0 %v1178
        %v1289 = vpop.f32.mrf.mxu0
        %v1290 = vadd.f32 0.0, %v1289
        %1291 = vmatmul.f32.gmra.mxu0 %v1180
        %v1292 = vpop.f32.mrf.mxu0
        %v1293 = vadd.f32 0.0, %v1292
        %1294 = vdwg.mxu0
        %1295 = vmatpush.msra.mxu0 %v600
        %1296 = vmatpush.msra.mxu0 %v599
        %1297 = vmatpush.msra.mxu0 %v598
        %1298 = vmatpush.msra.mxu0 %v597
        %1299 = vmatpush.msra.mxu0 %v596
        %1300 = vmatpush.msra.mxu0 %v595
        %1301 = vmatpush.msra.mxu0 %v594
        %1302 = vmatpush.msra.mxu0 %v593
        %1303 = vmatpush.msra.mxu0 %v592
        %1304 = vmatpush.msra.mxu0 %v591
        %1305 = vmatpush.msra.mxu0 %v590
        %1306 = vmatpush.msra.mxu0 %v589
        %1307 = vmatpush.msra.mxu0 %v588
        %1308 = vmatpush.msra.mxu0 %v587
        %1309 = vmatpush.msra.mxu0 %v586
        %1310 = vmatpush.msra.mxu0 %v585
        %1311 = vmatmul.f32.gmra.mxu0 %v1119
        %v1312 = vpop.f32.mrf.mxu0
        %v1313 = vadd.f32 %v1200, %v1312
        %1314 = vmatmul.f32.gmra.mxu0 %v1121
        %v1315 = vpop.f32.mrf.mxu0
        %v1316 = vadd.f32 %v1203, %v1315
        %1317 = vmatmul.f32.gmra.mxu0 %v1123
        %v1318 = vpop.f32.mrf.mxu0
        %v1319 = vadd.f32 %v1206, %v1318
        %1320 = vmatmul.f32.gmra.mxu0 %v1125
        %v1321 = vpop.f32.mrf.mxu0
        %v1322 = vadd.f32 %v1209, %v1321
        %1323 = vmatmul.f32.gmra.mxu0 %v1127
        %v1324 = vpop.f32.mrf.mxu0
        %v1325 = vadd.f32 %v1212, %v1324
        %1326 = vmatmul.f32.gmra.mxu0 %v1129
        %v1327 = vpop.f32.mrf.mxu0
        %v1328 = vadd.f32 %v1215, %v1327
        %1329 = vmatmul.f32.gmra.mxu0 %v1131
        %v1330 = vpop.f32.mrf.mxu0
        %v1331 = vadd.f32 %v1218, %v1330
        %1332 = vmatmul.f32.gmra.mxu0 %v1133
        %v1333 = vpop.f32.mrf.mxu0
        %v1334 = vadd.f32 %v1221, %v1333
        %1335 = vmatmul.f32.gmra.mxu0 %v1135
        %v1336 = vpop.f32.mrf.mxu0
        %v1337 = vadd.f32 %v1224, %v1336
        %1338 = vmatmul.f32.gmra.mxu0 %v1137
        %v1339 = vpop.f32.mrf.mxu0
        %v1340 = vadd.f32 %v1227, %v1339
        %1341 = vmatmul.f32.gmra.mxu0 %v1139
        %v1342 = vpop.f32.mrf.mxu0
        %v1343 = vadd.f32 %v1230, %v1342
        %1344 = vmatmul.f32.gmra.mxu0 %v1141
        %v1345 = vpop.f32.mrf.mxu0
        %v1346 = vadd.f32 %v1233, %v1345
        %1347 = vmatmul.f32.gmra.mxu0 %v1143
        %v1348 = vpop.f32.mrf.mxu0
        %v1349 = vadd.f32 %v1236, %v1348
        %1350 = vmatmul.f32.gmra.mxu0 %v1145
        %v1351 = vpop.f32.mrf.mxu0
        %v1352 = vadd.f32 %v1239, %v1351
        %1353 = vmatmul.f32.gmra.mxu0 %v1147
        %v1354 = vpop.f32.mrf.mxu0
        %v1355 = vadd.f32 %v1242, %v1354
        %1356 = vmatmul.f32.gmra.mxu0 %v1149
        %v1357 = vpop.f32.mrf.mxu0
        %v1358 = vadd.f32 %v1245, %v1357
        %1359 = vmatmul.f32.gmra.mxu0 %v1151
        %v1360 = vpop.f32.mrf.mxu0
        %v1361 = vadd.f32 %v1248, %v1360
        %1362 = vmatmul.f32.gmra.mxu0 %v1153
        %v1363 = vpop.f32.mrf.mxu0
        %v1364 = vadd.f32 %v1251, %v1363
        %1365 = vmatmul.f32.gmra.mxu0 %v1155
        %v1366 = vpop.f32.mrf.mxu0
        %v1367 = vadd.f32 %v1254, %v1366
        %1368 = vmatmul.f32.gmra.mxu0 %v1157
        %v1369 = vpop.f32.mrf.mxu0
        %v1370 = vadd.f32 %v1257, %v1369
        %1371 = vmatmul.f32.gmra.mxu0 %v1159
        %v1372 = vpop.f32.mrf.mxu0
        %v1373 = vadd.f32 %v1260, %v1372
        %1374 = vmatmul.f32.gmra.mxu0 %v1161
        %v1375 = vpop.f32.mrf.mxu0
        %v1376 = vadd.f32 %v1263, %v1375
        %1377 = vmatmul.f32.gmra.mxu0 %v1163
        %v1378 = vpop.f32.mrf.mxu0
        %v1379 = vadd.f32 %v1266, %v1378
        %1380 = vmatmul.f32.gmra.mxu0 %v1165
        %v1381 = vpop.f32.mrf.mxu0
        %v1382 = vadd.f32 %v1269, %v1381
        %1383 = vmatmul.f32.gmra.mxu0 %v1167
        %v1384 = vpop.f32.mrf.mxu0
        %v1385 = vadd.f32 %v1272, %v1384
        %1386 = vmatmul.f32.gmra.mxu0 %v1169
        %v1387 = vpop.f32.mrf.mxu0
        %v1388 = vadd.f32 %v1275, %v1387
        %1389 = vmatmul.f32.gmra.mxu0 %v1171
        %v1390 = vpop.f32.mrf.mxu0
        %v1391 = vadd.f32 %v1278, %v1390
        %1392 = vmatmul.f32.gmra.mxu0 %v1173
        %v1393 = vpop.f32.mrf.mxu0
        %v1394 = vadd.f32 %v1281, %v1393
        %1395 = vmatmul.f32.gmra.mxu0 %v1175
        %v1396 = vpop.f32.mrf.mxu0
        %v1397 = vadd.f32 %v1284, %v1396
        %1398 = vmatmul.f32.gmra.mxu0 %v1177
        %v1399 = vpop.f32.mrf.mxu0
        %v1400 = vadd.f32 %v1287, %v1399
        %1401 = vmatmul.f32.gmra.mxu0 %v1179
        %v1402 = vpop.f32.mrf.mxu0
        %v1403 = vadd.f32 %v1290, %v1402
        %1404 = vmatmul.f32.gmra.mxu0 %v1181
        %v1405 = vpop.f32.mrf.mxu0
        %v1406 = vadd.f32 %v1293, %v1405
        %1407 = vdwg.mxu0
        %v1408 = vadd.f32 %v1022, %v1313
        %v1409 = vadd.f32 %v1025, %v1316
        %v1410 = vadd.f32 %v1028, %v1319
        %v1411 = vadd.f32 %v1031, %v1322
        %v1412 = vadd.f32 %v1034, %v1325
        %v1413 = vadd.f32 %v1037, %v1328
        %v1414 = vadd.f32 %v1040, %v1331
        %v1415 = vadd.f32 %v1043, %v1334
        %v1416 = vadd.f32 %v1046, %v1337
        %v1417 = vadd.f32 %v1049, %v1340
        %v1418 = vadd.f32 %v1052, %v1343
        %v1419 = vadd.f32 %v1055, %v1346
        %v1420 = vadd.f32 %v1058, %v1349
        %v1421 = vadd.f32 %v1061, %v1352
        %v1422 = vadd.f32 %v1064, %v1355
        %v1423 = vadd.f32 %v1067, %v1358
        %v1424 = vadd.f32 %v1070, %v1361
        %v1425 = vadd.f32 %v1073, %v1364
        %v1426 = vadd.f32 %v1076, %v1367
        %v1427 = vadd.f32 %v1079, %v1370
        %v1428 = vadd.f32 %v1082, %v1373
        %v1429 = vadd.f32 %v1085, %v1376
        %v1430 = vadd.f32 %v1088, %v1379
        %v1431 = vadd.f32 %v1091, %v1382
        %v1432 = vadd.f32 %v1094, %v1385
        %v1433 = vadd.f32 %v1097, %v1388
        %v1434 = vadd.f32 %v1100, %v1391
        %v1435 = vadd.f32 %v1103, %v1394
        %v1436 = vadd.f32 %v1106, %v1397
        %v1437 = vadd.f32 %v1109, %v1400
        %v1438 = vadd.f32 %v1112, %v1403
        %v1439 = vadd.f32 %v1115, %v1406
        %v1440 = vld [vmem:[%s269] sm:$0xff]
        %v1441 = vld [vmem:[%s269 + $0x8] sm:$0xff]
        %v1442 = vld [vmem:[%s269 + $0x10] sm:$0xff]
        %v1443 = vld [vmem:[%s269 + $0x18] sm:$0xff]
        %v1444 = vld [vmem:[%s269 + $0x20] sm:$0xff]
        %v1445 = vld [vmem:[%s269 + $0x28] sm:$0xff]
        %v1446 = vld [vmem:[%s269 + $0x30] sm:$0xff]
        %v1447 = vld [vmem:[%s269 + $0x38] sm:$0xff]
        %v1448 = vld [vmem:[%s269 + $0x40] sm:$0xff]
        %v1449 = vld [vmem:[%s269 + $0x48] sm:$0xff]
        %v1450 = vld [vmem:[%s269 + $0x50] sm:$0xff]
        %v1451 = vld [vmem:[%s269 + $0x58] sm:$0xff]
        %v1452 = vld [vmem:[%s269 + $0x60] sm:$0xff]
        %v1453 = vld [vmem:[%s269 + $0x68] sm:$0xff]
        %v1454 = vld [vmem:[%s269 + $0x70] sm:$0xff]
        %v1455 = vld [vmem:[%s269 + $0x78] sm:$0xff]
        %v1456 = vld [vmem:[%s269 + $0x80] sm:$0xff]
        %v1457 = vld [vmem:[%s269 + $0x88] sm:$0xff]
        %v1458 = vld [vmem:[%s269 + $0x90] sm:$0xff]
        %v1459 = vld [vmem:[%s269 + $0x98] sm:$0xff]
        %v1460 = vld [vmem:[%s269 + $0xa0] sm:$0xff]
        %v1461 = vld [vmem:[%s269 + $0xa8] sm:$0xff]
        %v1462 = vld [vmem:[%s269 + $0xb0] sm:$0xff]
        %v1463 = vld [vmem:[%s269 + $0xb8] sm:$0xff]
        %v1464 = vld [vmem:[%s269 + $0xc0] sm:$0xff]
        %v1465 = vld [vmem:[%s269 + $0xc8] sm:$0xff]
        %v1466 = vld [vmem:[%s269 + $0xd0] sm:$0xff]
        %v1467 = vld [vmem:[%s269 + $0xd8] sm:$0xff]
        %v1468 = vld [vmem:[%s269 + $0xe0] sm:$0xff]
        %v1469 = vld [vmem:[%s269 + $0xe8] sm:$0xff]
        %v1470 = vld [vmem:[%s269 + $0xf0] sm:$0xff]
        %v1471 = vld [vmem:[%s269 + $0xf8] sm:$0xff]
        %p1472 = scmp.gt.s32.totalorder %s29, 0
        %s1473 = scalar_select %p1472, 4, 0
        %s1474 = scalar_select %p1472, 2, 0
        %v1475 = vstv %s1473
        %vm1476 = vcmp.lt.s32.totalorder %v406, %v1475
        %1477 = vrot.lane.b32.xlu0 %v1440, 4
        %v1478 = vpop.permute.xlu0 %1477
        %1479 = vrot.lane.b32.xlu0 %v1441, 4
        %v1480 = vpop.permute.xlu0 %1479
        %1481 = vrot.lane.b32.xlu0 %v1442, 4
        %v1482 = vpop.permute.xlu0 %1481
        %1483 = vrot.lane.b32.xlu0 %v1443, 4
        %v1484 = vpop.permute.xlu0 %1483
        %1485 = vrot.lane.b32.xlu0 %v1444, 4
        %v1486 = vpop.permute.xlu0 %1485
        %1487 = vrot.lane.b32.xlu0 %v1445, 4
        %v1488 = vpop.permute.xlu0 %1487
        %1489 = vrot.lane.b32.xlu0 %v1446, 4
        %v1490 = vpop.permute.xlu0 %1489
        %1491 = vrot.lane.b32.xlu0 %v1447, 4
        %v1492 = vpop.permute.xlu0 %1491
        %1493 = vrot.lane.b32.xlu0 %v1448, 4
        %v1494 = vpop.permute.xlu0 %1493
        %1495 = vrot.lane.b32.xlu0 %v1449, 4
        %v1496 = vpop.permute.xlu0 %1495
        %1497 = vrot.lane.b32.xlu0 %v1450, 4
        %v1498 = vpop.permute.xlu0 %1497
        %1499 = vrot.lane.b32.xlu0 %v1451, 4
        %v1500 = vpop.permute.xlu0 %1499
        %1501 = vrot.lane.b32.xlu0 %v1452, 4
        %v1502 = vpop.permute.xlu0 %1501
        %1503 = vrot.lane.b32.xlu0 %v1453, 4
        %v1504 = vpop.permute.xlu0 %1503
        %1505 = vrot.lane.b32.xlu0 %v1454, 4
        %v1506 = vpop.permute.xlu0 %1505
        %1507 = vrot.lane.b32.xlu0 %v1455, 4
        %v1508 = vpop.permute.xlu0 %1507
        %1509 = vrot.lane.b32.xlu0 %v1456, 4
        %v1510 = vpop.permute.xlu0 %1509
        %1511 = vrot.lane.b32.xlu0 %v1457, 4
        %v1512 = vpop.permute.xlu0 %1511
        %1513 = vrot.lane.b32.xlu0 %v1458, 4
        %v1514 = vpop.permute.xlu0 %1513
        %1515 = vrot.lane.b32.xlu0 %v1459, 4
        %v1516 = vpop.permute.xlu0 %1515
        %1517 = vrot.lane.b32.xlu0 %v1460, 4
        %v1518 = vpop.permute.xlu0 %1517
        %1519 = vrot.lane.b32.xlu0 %v1461, 4
        %v1520 = vpop.permute.xlu0 %1519
        %1521 = vrot.lane.b32.xlu0 %v1462, 4
        %v1522 = vpop.permute.xlu0 %1521
        %1523 = vrot.lane.b32.xlu0 %v1463, 4
        %v1524 = vpop.permute.xlu0 %1523
        %1525 = vrot.lane.b32.xlu0 %v1464, 4
        %v1526 = vpop.permute.xlu0 %1525
        %1527 = vrot.lane.b32.xlu0 %v1465, 4
        %v1528 = vpop.permute.xlu0 %1527
        %1529 = vrot.lane.b32.xlu0 %v1466, 4
        %v1530 = vpop.permute.xlu0 %1529
        %1531 = vrot.lane.b32.xlu0 %v1467, 4
        %v1532 = vpop.permute.xlu0 %1531
        %1533 = vrot.lane.b32.xlu0 %v1468, 4
        %v1534 = vpop.permute.xlu0 %1533
        %1535 = vrot.lane.b32.xlu0 %v1469, 4
        %v1536 = vpop.permute.xlu0 %1535
        %1537 = vrot.lane.b32.xlu0 %v1470, 4
        %v1538 = vpop.permute.xlu0 %1537
        %1539 = vrot.lane.b32.xlu0 %v1471, 4
        %v1540 = vpop.permute.xlu0 %1539
        %v1541 = vsel %vm1476, %v1478, 0.0
        %v1542 = vsel %vm1476, %v1480, 0.0
        %v1543 = vsel %vm1476, %v1482, 0.0
        %v1544 = vsel %vm1476, %v1484, 0.0
        %v1545 = vsel %vm1476, %v1486, 0.0
        %v1546 = vsel %vm1476, %v1488, 0.0
        %v1547 = vsel %vm1476, %v1490, 0.0
        %v1548 = vsel %vm1476, %v1492, 0.0
        %v1549 = vsel %vm1476, %v1494, 0.0
        %v1550 = vsel %vm1476, %v1496, 0.0
        %v1551 = vsel %vm1476, %v1498, 0.0
        %v1552 = vsel %vm1476, %v1500, 0.0
        %v1553 = vsel %vm1476, %v1502, 0.0
        %v1554 = vsel %vm1476, %v1504, 0.0
        %v1555 = vsel %vm1476, %v1506, 0.0
        %v1556 = vsel %vm1476, %v1508, 0.0
        %v1557 = vsel %vm1476, %v1510, 0.0
        %v1558 = vsel %vm1476, %v1512, 0.0
        %v1559 = vsel %vm1476, %v1514, 0.0
        %v1560 = vsel %vm1476, %v1516, 0.0
        %v1561 = vsel %vm1476, %v1518, 0.0
        %v1562 = vsel %vm1476, %v1520, 0.0
        %v1563 = vsel %vm1476, %v1522, 0.0
        %v1564 = vsel %vm1476, %v1524, 0.0
        %v1565 = vsel %vm1476, %v1526, 0.0
        %v1566 = vsel %vm1476, %v1528, 0.0
        %v1567 = vsel %vm1476, %v1530, 0.0
        %v1568 = vsel %vm1476, %v1532, 0.0
        %v1569 = vsel %vm1476, %v1534, 0.0
        %v1570 = vsel %vm1476, %v1536, 0.0
        %v1571 = vsel %vm1476, %v1538, 0.0
        %v1572 = vsel %vm1476, %v1540, 0.0
        %v1573 = vstv %s1474
        %vm1574 = vcmp.lt.s32.totalorder %v406, %v1573
        %1575 = vrot.lane.b32.xlu0 %v1440, 2
        %v1576 = vpop.permute.xlu0 %1575
        %1577 = vrot.lane.b32.xlu0 %v1441, 2
        %v1578 = vpop.permute.xlu0 %1577
        %1579 = vrot.lane.b32.xlu0 %v1442, 2
        %v1580 = vpop.permute.xlu0 %1579
        %1581 = vrot.lane.b32.xlu0 %v1443, 2
        %v1582 = vpop.permute.xlu0 %1581
        %1583 = vrot.lane.b32.xlu0 %v1444, 2
        %v1584 = vpop.permute.xlu0 %1583
        %1585 = vrot.lane.b32.xlu0 %v1445, 2
        %v1586 = vpop.permute.xlu0 %1585
        %1587 = vrot.lane.b32.xlu0 %v1446, 2
        %v1588 = vpop.permute.xlu0 %1587
        %1589 = vrot.lane.b32.xlu0 %v1447, 2
        %v1590 = vpop.permute.xlu0 %1589
        %1591 = vrot.lane.b32.xlu0 %v1448, 2
        %v1592 = vpop.permute.xlu0 %1591
        %1593 = vrot.lane.b32.xlu0 %v1449, 2
        %v1594 = vpop.permute.xlu0 %1593
        %1595 = vrot.lane.b32.xlu0 %v1450, 2
        %v1596 = vpop.permute.xlu0 %1595
        %1597 = vrot.lane.b32.xlu0 %v1451, 2
        %v1598 = vpop.permute.xlu0 %1597
        %1599 = vrot.lane.b32.xlu0 %v1452, 2
        %v1600 = vpop.permute.xlu0 %1599
        %1601 = vrot.lane.b32.xlu0 %v1453, 2
        %v1602 = vpop.permute.xlu0 %1601
        %1603 = vrot.lane.b32.xlu0 %v1454, 2
        %v1604 = vpop.permute.xlu0 %1603
        %1605 = vrot.lane.b32.xlu0 %v1455, 2
        %v1606 = vpop.permute.xlu0 %1605
        %1607 = vrot.lane.b32.xlu0 %v1456, 2
        %v1608 = vpop.permute.xlu0 %1607
        %1609 = vrot.lane.b32.xlu0 %v1457, 2
        %v1610 = vpop.permute.xlu0 %1609
        %1611 = vrot.lane.b32.xlu0 %v1458, 2
        %v1612 = vpop.permute.xlu0 %1611
        %1613 = vrot.lane.b32.xlu0 %v1459, 2
        %v1614 = vpop.permute.xlu0 %1613
        %1615 = vrot.lane.b32.xlu0 %v1460, 2
        %v1616 = vpop.permute.xlu0 %1615
        %1617 = vrot.lane.b32.xlu0 %v1461, 2
        %v1618 = vpop.permute.xlu0 %1617
        %1619 = vrot.lane.b32.xlu0 %v1462, 2
        %v1620 = vpop.permute.xlu0 %1619
        %1621 = vrot.lane.b32.xlu0 %v1463, 2
        %v1622 = vpop.permute.xlu0 %1621
        %1623 = vrot.lane.b32.xlu0 %v1464, 2
        %v1624 = vpop.permute.xlu0 %1623
        %1625 = vrot.lane.b32.xlu0 %v1465, 2
        %v1626 = vpop.permute.xlu0 %1625
        %1627 = vrot.lane.b32.xlu0 %v1466, 2
        %v1628 = vpop.permute.xlu0 %1627
        %1629 = vrot.lane.b32.xlu0 %v1467, 2
        %v1630 = vpop.permute.xlu0 %1629
        %1631 = vrot.lane.b32.xlu0 %v1468, 2
        %v1632 = vpop.permute.xlu0 %1631
        %1633 = vrot.lane.b32.xlu0 %v1469, 2
        %v1634 = vpop.permute.xlu0 %1633
        %1635 = vrot.lane.b32.xlu0 %v1470, 2
        %v1636 = vpop.permute.xlu0 %1635
        %1637 = vrot.lane.b32.xlu0 %v1471, 2
        %v1638 = vpop.permute.xlu0 %1637
        %v1639 = vsel %vm1574, %v1576, 0.0
        %v1640 = vsel %vm1574, %v1578, 0.0
        %v1641 = vsel %vm1574, %v1580, 0.0
        %v1642 = vsel %vm1574, %v1582, 0.0
        %v1643 = vsel %vm1574, %v1584, 0.0
        %v1644 = vsel %vm1574, %v1586, 0.0
        %v1645 = vsel %vm1574, %v1588, 0.0
        %v1646 = vsel %vm1574, %v1590, 0.0
        %v1647 = vsel %vm1574, %v1592, 0.0
        %v1648 = vsel %vm1574, %v1594, 0.0
        %v1649 = vsel %vm1574, %v1596, 0.0
        %v1650 = vsel %vm1574, %v1598, 0.0
        %v1651 = vsel %vm1574, %v1600, 0.0
        %v1652 = vsel %vm1574, %v1602, 0.0
        %v1653 = vsel %vm1574, %v1604, 0.0
        %v1654 = vsel %vm1574, %v1606, 0.0
        %v1655 = vsel %vm1574, %v1608, 0.0
        %v1656 = vsel %vm1574, %v1610, 0.0
        %v1657 = vsel %vm1574, %v1612, 0.0
        %v1658 = vsel %vm1574, %v1614, 0.0
        %v1659 = vsel %vm1574, %v1616, 0.0
        %v1660 = vsel %vm1574, %v1618, 0.0
        %v1661 = vsel %vm1574, %v1620, 0.0
        %v1662 = vsel %vm1574, %v1622, 0.0
        %v1663 = vsel %vm1574, %v1624, 0.0
        %v1664 = vsel %vm1574, %v1626, 0.0
        %v1665 = vsel %vm1574, %v1628, 0.0
        %v1666 = vsel %vm1574, %v1630, 0.0
        %v1667 = vsel %vm1574, %v1632, 0.0
        %v1668 = vsel %vm1574, %v1634, 0.0
        %v1669 = vsel %vm1574, %v1636, 0.0
        %v1670 = vsel %vm1574, %v1638, 0.0
        %1671 = vmatpush.msra.mxu0 %v1654
        %1672 = vmatpush.msra.mxu0 %v1653
        %1673 = vmatpush.msra.mxu0 %v1652
        %1674 = vmatpush.msra.mxu0 %v1651
        %1675 = vmatpush.msra.mxu0 %v1650
        %1676 = vmatpush.msra.mxu0 %v1649
        %1677 = vmatpush.msra.mxu0 %v1648
        %1678 = vmatpush.msra.mxu0 %v1647
        %1679 = vmatpush.msra.mxu0 %v1646
        %1680 = vmatpush.msra.mxu0 %v1645
        %1681 = vmatpush.msra.mxu0 %v1644
        %1682 = vmatpush.msra.mxu0 %v1643
        %1683 = vmatpush.msra.mxu0 %v1642
        %1684 = vmatpush.msra.mxu0 %v1641
        %1685 = vmatpush.msra.mxu0 %v1640
        %1686 = vmatpush.msra.mxu0 %v1639
        %1687 = vmatmul.f32.gmra.mxu0 %v1118
        %v1688 = vpop.f32.mrf.mxu0
        %v1689 = vadd.f32 0.0, %v1688
        %1690 = vmatmul.f32.gmra.mxu0 %v1120
        %v1691 = vpop.f32.mrf.mxu0
        %v1692 = vadd.f32 0.0, %v1691
        %1693 = vmatmul.f32.gmra.mxu0 %v1122
        %v1694 = vpop.f32.mrf.mxu0
        %v1695 = vadd.f32 0.0, %v1694
        %1696 = vmatmul.f32.gmra.mxu0 %v1124
        %v1697 = vpop.f32.mrf.mxu0
        %v1698 = vadd.f32 0.0, %v1697
        %1699 = vmatmul.f32.gmra.mxu0 %v1126
        %v1700 = vpop.f32.mrf.mxu0
        %v1701 = vadd.f32 0.0, %v1700
        %1702 = vmatmul.f32.gmra.mxu0 %v1128
        %v1703 = vpop.f32.mrf.mxu0
        %v1704 = vadd.f32 0.0, %v1703
        %1705 = vmatmul.f32.gmra.mxu0 %v1130
        %v1706 = vpop.f32.mrf.mxu0
        %v1707 = vadd.f32 0.0, %v1706
        %1708 = vmatmul.f32.gmra.mxu0 %v1132
        %v1709 = vpop.f32.mrf.mxu0
        %v1710 = vadd.f32 0.0, %v1709
        %1711 = vmatmul.f32.gmra.mxu0 %v1134
        %v1712 = vpop.f32.mrf.mxu0
        %v1713 = vadd.f32 0.0, %v1712
        %1714 = vmatmul.f32.gmra.mxu0 %v1136
        %v1715 = vpop.f32.mrf.mxu0
        %v1716 = vadd.f32 0.0, %v1715
        %1717 = vmatmul.f32.gmra.mxu0 %v1138
        %v1718 = vpop.f32.mrf.mxu0
        %v1719 = vadd.f32 0.0, %v1718
        %1720 = vmatmul.f32.gmra.mxu0 %v1140
        %v1721 = vpop.f32.mrf.mxu0
        %v1722 = vadd.f32 0.0, %v1721
        %1723 = vmatmul.f32.gmra.mxu0 %v1142
        %v1724 = vpop.f32.mrf.mxu0
        %v1725 = vadd.f32 0.0, %v1724
        %1726 = vmatmul.f32.gmra.mxu0 %v1144
        %v1727 = vpop.f32.mrf.mxu0
        %v1728 = vadd.f32 0.0, %v1727
        %1729 = vmatmul.f32.gmra.mxu0 %v1146
        %v1730 = vpop.f32.mrf.mxu0
        %v1731 = vadd.f32 0.0, %v1730
        %1732 = vmatmul.f32.gmra.mxu0 %v1148
        %v1733 = vpop.f32.mrf.mxu0
        %v1734 = vadd.f32 0.0, %v1733
        %1735 = vmatmul.f32.gmra.mxu0 %v1150
        %v1736 = vpop.f32.mrf.mxu0
        %v1737 = vadd.f32 0.0, %v1736
        %1738 = vmatmul.f32.gmra.mxu0 %v1152
        %v1739 = vpop.f32.mrf.mxu0
        %v1740 = vadd.f32 0.0, %v1739
        %1741 = vmatmul.f32.gmra.mxu0 %v1154
        %v1742 = vpop.f32.mrf.mxu0
        %v1743 = vadd.f32 0.0, %v1742
        %1744 = vmatmul.f32.gmra.mxu0 %v1156
        %v1745 = vpop.f32.mrf.mxu0
        %v1746 = vadd.f32 0.0, %v1745
        %1747 = vmatmul.f32.gmra.mxu0 %v1158
        %v1748 = vpop.f32.mrf.mxu0
        %v1749 = vadd.f32 0.0, %v1748
        %1750 = vmatmul.f32.gmra.mxu0 %v1160
        %v1751 = vpop.f32.mrf.mxu0
        %v1752 = vadd.f32 0.0, %v1751
        %1753 = vmatmul.f32.gmra.mxu0 %v1162
        %v1754 = vpop.f32.mrf.mxu0
        %v1755 = vadd.f32 0.0, %v1754
        %1756 = vmatmul.f32.gmra.mxu0 %v1164
        %v1757 = vpop.f32.mrf.mxu0
        %v1758 = vadd.f32 0.0, %v1757
        %1759 = vmatmul.f32.gmra.mxu0 %v1166
        %v1760 = vpop.f32.mrf.mxu0
        %v1761 = vadd.f32 0.0, %v1760
        %1762 = vmatmul.f32.gmra.mxu0 %v1168
        %v1763 = vpop.f32.mrf.mxu0
        %v1764 = vadd.f32 0.0, %v1763
        %1765 = vmatmul.f32.gmra.mxu0 %v1170
        %v1766 = vpop.f32.mrf.mxu0
        %v1767 = vadd.f32 0.0, %v1766
        %1768 = vmatmul.f32.gmra.mxu0 %v1172
        %v1769 = vpop.f32.mrf.mxu0
        %v1770 = vadd.f32 0.0, %v1769
        %1771 = vmatmul.f32.gmra.mxu0 %v1174
        %v1772 = vpop.f32.mrf.mxu0
        %v1773 = vadd.f32 0.0, %v1772
        %1774 = vmatmul.f32.gmra.mxu0 %v1176
        %v1775 = vpop.f32.mrf.mxu0
        %v1776 = vadd.f32 0.0, %v1775
        %1777 = vmatmul.f32.gmra.mxu0 %v1178
        %v1778 = vpop.f32.mrf.mxu0
        %v1779 = vadd.f32 0.0, %v1778
        %1780 = vmatmul.f32.gmra.mxu0 %v1180
        %v1781 = vpop.f32.mrf.mxu0
        %v1782 = vadd.f32 0.0, %v1781
        %1783 = vdwg.mxu0
        %1784 = vmatpush.msra.mxu0 %v1670
        %1785 = vmatpush.msra.mxu0 %v1669
        %1786 = vmatpush.msra.mxu0 %v1668
        %1787 = vmatpush.msra.mxu0 %v1667
        %1788 = vmatpush.msra.mxu0 %v1666
        %1789 = vmatpush.msra.mxu0 %v1665
        %1790 = vmatpush.msra.mxu0 %v1664
        %1791 = vmatpush.msra.mxu0 %v1663
        %1792 = vmatpush.msra.mxu0 %v1662
        %1793 = vmatpush.msra.mxu0 %v1661
        %1794 = vmatpush.msra.mxu0 %v1660
        %1795 = vmatpush.msra.mxu0 %v1659
        %1796 = vmatpush.msra.mxu0 %v1658
        %1797 = vmatpush.msra.mxu0 %v1657
        %1798 = vmatpush.msra.mxu0 %v1656
        %1799 = vmatpush.msra.mxu0 %v1655
        %1800 = vmatmul.f32.gmra.mxu0 %v1119
        %v1801 = vpop.f32.mrf.mxu0
        %v1802 = vadd.f32 %v1689, %v1801
        %1803 = vmatmul.f32.gmra.mxu0 %v1121
        %v1804 = vpop.f32.mrf.mxu0
        %v1805 = vadd.f32 %v1692, %v1804
        %1806 = vmatmul.f32.gmra.mxu0 %v1123
        %v1807 = vpop.f32.mrf.mxu0
        %v1808 = vadd.f32 %v1695, %v1807
        %1809 = vmatmul.f32.gmra.mxu0 %v1125
        %v1810 = vpop.f32.mrf.mxu0
        %v1811 = vadd.f32 %v1698, %v1810
        %1812 = vmatmul.f32.gmra.mxu0 %v1127
        %v1813 = vpop.f32.mrf.mxu0
        %v1814 = vadd.f32 %v1701, %v1813
        %1815 = vmatmul.f32.gmra.mxu0 %v1129
        %v1816 = vpop.f32.mrf.mxu0
        %v1817 = vadd.f32 %v1704, %v1816
        %1818 = vmatmul.f32.gmra.mxu0 %v1131
        %v1819 = vpop.f32.mrf.mxu0
        %v1820 = vadd.f32 %v1707, %v1819
        %1821 = vmatmul.f32.gmra.mxu0 %v1133
        %v1822 = vpop.f32.mrf.mxu0
        %v1823 = vadd.f32 %v1710, %v1822
        %1824 = vmatmul.f32.gmra.mxu0 %v1135
        %v1825 = vpop.f32.mrf.mxu0
        %v1826 = vadd.f32 %v1713, %v1825
        %1827 = vmatmul.f32.gmra.mxu0 %v1137
        %v1828 = vpop.f32.mrf.mxu0
        %v1829 = vadd.f32 %v1716, %v1828
        %1830 = vmatmul.f32.gmra.mxu0 %v1139
        %v1831 = vpop.f32.mrf.mxu0
        %v1832 = vadd.f32 %v1719, %v1831
        %1833 = vmatmul.f32.gmra.mxu0 %v1141
        %v1834 = vpop.f32.mrf.mxu0
        %v1835 = vadd.f32 %v1722, %v1834
        %1836 = vmatmul.f32.gmra.mxu0 %v1143
        %v1837 = vpop.f32.mrf.mxu0
        %v1838 = vadd.f32 %v1725, %v1837
        %1839 = vmatmul.f32.gmra.mxu0 %v1145
        %v1840 = vpop.f32.mrf.mxu0
        %v1841 = vadd.f32 %v1728, %v1840
        %1842 = vmatmul.f32.gmra.mxu0 %v1147
        %v1843 = vpop.f32.mrf.mxu0
        %v1844 = vadd.f32 %v1731, %v1843
        %1845 = vmatmul.f32.gmra.mxu0 %v1149
        %v1846 = vpop.f32.mrf.mxu0
        %v1847 = vadd.f32 %v1734, %v1846
        %1848 = vmatmul.f32.gmra.mxu0 %v1151
        %v1849 = vpop.f32.mrf.mxu0
        %v1850 = vadd.f32 %v1737, %v1849
        %1851 = vmatmul.f32.gmra.mxu0 %v1153
        %v1852 = vpop.f32.mrf.mxu0
        %v1853 = vadd.f32 %v1740, %v1852
        %1854 = vmatmul.f32.gmra.mxu0 %v1155
        %v1855 = vpop.f32.mrf.mxu0
        %v1856 = vadd.f32 %v1743, %v1855
        %1857 = vmatmul.f32.gmra.mxu0 %v1157
        %v1858 = vpop.f32.mrf.mxu0
        %v1859 = vadd.f32 %v1746, %v1858
        %1860 = vmatmul.f32.gmra.mxu0 %v1159
        %v1861 = vpop.f32.mrf.mxu0
        %v1862 = vadd.f32 %v1749, %v1861
        %1863 = vmatmul.f32.gmra.mxu0 %v1161
        %v1864 = vpop.f32.mrf.mxu0
        %v1865 = vadd.f32 %v1752, %v1864
        %1866 = vmatmul.f32.gmra.mxu0 %v1163
        %v1867 = vpop.f32.mrf.mxu0
        %v1868 = vadd.f32 %v1755, %v1867
        %1869 = vmatmul.f32.gmra.mxu0 %v1165
        %v1870 = vpop.f32.mrf.mxu0
        %v1871 = vadd.f32 %v1758, %v1870
        %1872 = vmatmul.f32.gmra.mxu0 %v1167
        %v1873 = vpop.f32.mrf.mxu0
        %v1874 = vadd.f32 %v1761, %v1873
        %1875 = vmatmul.f32.gmra.mxu0 %v1169
        %v1876 = vpop.f32.mrf.mxu0
        %v1877 = vadd.f32 %v1764, %v1876
        %1878 = vmatmul.f32.gmra.mxu0 %v1171
        %v1879 = vpop.f32.mrf.mxu0
        %v1880 = vadd.f32 %v1767, %v1879
        %1881 = vmatmul.f32.gmra.mxu0 %v1173
        %v1882 = vpop.f32.mrf.mxu0
        %v1883 = vadd.f32 %v1770, %v1882
        %1884 = vmatmul.f32.gmra.mxu0 %v1175
        %v1885 = vpop.f32.mrf.mxu0
        %v1886 = vadd.f32 %v1773, %v1885
        %1887 = vmatmul.f32.gmra.mxu0 %v1177
        %v1888 = vpop.f32.mrf.mxu0
        %v1889 = vadd.f32 %v1776, %v1888
        %1890 = vmatmul.f32.gmra.mxu0 %v1179
        %v1891 = vpop.f32.mrf.mxu0
        %v1892 = vadd.f32 %v1779, %v1891
        %1893 = vmatmul.f32.gmra.mxu0 %v1181
        %v1894 = vpop.f32.mrf.mxu0
        %v1895 = vadd.f32 %v1782, %v1894
        %1896 = vdwg.mxu0
        %1897 = vmatpush.msra.mxu0 %v1556
        %1898 = vmatpush.msra.mxu0 %v1555
        %1899 = vmatpush.msra.mxu0 %v1554
        %1900 = vmatpush.msra.mxu0 %v1553
        %1901 = vmatpush.msra.mxu0 %v1552
        %1902 = vmatpush.msra.mxu0 %v1551
        %1903 = vmatpush.msra.mxu0 %v1550
        %1904 = vmatpush.msra.mxu0 %v1549
        %1905 = vmatpush.msra.mxu0 %v1548
        %1906 = vmatpush.msra.mxu0 %v1547
        %1907 = vmatpush.msra.mxu0 %v1546
        %1908 = vmatpush.msra.mxu0 %v1545
        %1909 = vmatpush.msra.mxu0 %v1544
        %1910 = vmatpush.msra.mxu0 %v1543
        %1911 = vmatpush.msra.mxu0 %v1542
        %1912 = vmatpush.msra.mxu0 %v1541
        %1913 = vmatmul.f32.gmra.mxu0 %v601
        %v1914 = vpop.f32.mrf.mxu0
        %v1915 = vadd.f32 %v1802, %v1914
        %1916 = vmatmul.f32.gmra.mxu0 %v603
        %v1917 = vpop.f32.mrf.mxu0
        %v1918 = vadd.f32 %v1805, %v1917
        %1919 = vmatmul.f32.gmra.mxu0 %v605
        %v1920 = vpop.f32.mrf.mxu0
        %v1921 = vadd.f32 %v1808, %v1920
        %1922 = vmatmul.f32.gmra.mxu0 %v607
        %v1923 = vpop.f32.mrf.mxu0
        %v1924 = vadd.f32 %v1811, %v1923
        %1925 = vmatmul.f32.gmra.mxu0 %v609
        %v1926 = vpop.f32.mrf.mxu0
        %v1927 = vadd.f32 %v1814, %v1926
        %1928 = vmatmul.f32.gmra.mxu0 %v611
        %v1929 = vpop.f32.mrf.mxu0
        %v1930 = vadd.f32 %v1817, %v1929
        %1931 = vmatmul.f32.gmra.mxu0 %v613
        %v1932 = vpop.f32.mrf.mxu0
        %v1933 = vadd.f32 %v1820, %v1932
        %1934 = vmatmul.f32.gmra.mxu0 %v615
        %v1935 = vpop.f32.mrf.mxu0
        %v1936 = vadd.f32 %v1823, %v1935
        %1937 = vmatmul.f32.gmra.mxu0 %v617
        %v1938 = vpop.f32.mrf.mxu0
        %v1939 = vadd.f32 %v1826, %v1938
        %1940 = vmatmul.f32.gmra.mxu0 %v619
        %v1941 = vpop.f32.mrf.mxu0
        %v1942 = vadd.f32 %v1829, %v1941
        %1943 = vmatmul.f32.gmra.mxu0 %v621
        %v1944 = vpop.f32.mrf.mxu0
        %v1945 = vadd.f32 %v1832, %v1944
        %1946 = vmatmul.f32.gmra.mxu0 %v623
        %v1947 = vpop.f32.mrf.mxu0
        %v1948 = vadd.f32 %v1835, %v1947
        %1949 = vmatmul.f32.gmra.mxu0 %v625
        %v1950 = vpop.f32.mrf.mxu0
        %v1951 = vadd.f32 %v1838, %v1950
        %1952 = vmatmul.f32.gmra.mxu0 %v627
        %v1953 = vpop.f32.mrf.mxu0
        %v1954 = vadd.f32 %v1841, %v1953
        %1955 = vmatmul.f32.gmra.mxu0 %v629
        %v1956 = vpop.f32.mrf.mxu0
        %v1957 = vadd.f32 %v1844, %v1956
        %1958 = vmatmul.f32.gmra.mxu0 %v631
        %v1959 = vpop.f32.mrf.mxu0
        %v1960 = vadd.f32 %v1847, %v1959
        %1961 = vmatmul.f32.gmra.mxu0 %v633
        %v1962 = vpop.f32.mrf.mxu0
        %v1963 = vadd.f32 %v1850, %v1962
        %1964 = vmatmul.f32.gmra.mxu0 %v635
        %v1965 = vpop.f32.mrf.mxu0
        %v1966 = vadd.f32 %v1853, %v1965
        %1967 = vmatmul.f32.gmra.mxu0 %v637
        %v1968 = vpop.f32.mrf.mxu0
        %v1969 = vadd.f32 %v1856, %v1968
        %1970 = vmatmul.f32.gmra.mxu0 %v639
        %v1971 = vpop.f32.mrf.mxu0
        %v1972 = vadd.f32 %v1859, %v1971
        %1973 = vmatmul.f32.gmra.mxu0 %v641
        %v1974 = vpop.f32.mrf.mxu0
        %v1975 = vadd.f32 %v1862, %v1974
        %1976 = vmatmul.f32.gmra.mxu0 %v643
        %v1977 = vpop.f32.mrf.mxu0
        %v1978 = vadd.f32 %v1865, %v1977
        %1979 = vmatmul.f32.gmra.mxu0 %v645
        %v1980 = vpop.f32.mrf.mxu0
        %v1981 = vadd.f32 %v1868, %v1980
        %1982 = vmatmul.f32.gmra.mxu0 %v647
        %v1983 = vpop.f32.mrf.mxu0
        %v1984 = vadd.f32 %v1871, %v1983
        %1985 = vmatmul.f32.gmra.mxu0 %v649
        %v1986 = vpop.f32.mrf.mxu0
        %v1987 = vadd.f32 %v1874, %v1986
        %1988 = vmatmul.f32.gmra.mxu0 %v651
        %v1989 = vpop.f32.mrf.mxu0
        %v1990 = vadd.f32 %v1877, %v1989
        %1991 = vmatmul.f32.gmra.mxu0 %v653
        %v1992 = vpop.f32.mrf.mxu0
        %v1993 = vadd.f32 %v1880, %v1992
        %1994 = vmatmul.f32.gmra.mxu0 %v655
        %v1995 = vpop.f32.mrf.mxu0
        %v1996 = vadd.f32 %v1883, %v1995
        %1997 = vmatmul.f32.gmra.mxu0 %v657
        %v1998 = vpop.f32.mrf.mxu0
        %v1999 = vadd.f32 %v1886, %v1998
        %2000 = vmatmul.f32.gmra.mxu0 %v659
        %v2001 = vpop.f32.mrf.mxu0
        %v2002 = vadd.f32 %v1889, %v2001
        %2003 = vmatmul.f32.gmra.mxu0 %v661
        %v2004 = vpop.f32.mrf.mxu0
        %v2005 = vadd.f32 %v1892, %v2004
        %2006 = vmatmul.f32.gmra.mxu0 %v663
        %v2007 = vpop.f32.mrf.mxu0
        %v2008 = vadd.f32 %v1895, %v2007
        %2009 = vdwg.mxu0
        %2010 = vmatpush.msra.mxu0 %v1572
        %2011 = vmatpush.msra.mxu0 %v1571
        %2012 = vmatpush.msra.mxu0 %v1570
        %2013 = vmatpush.msra.mxu0 %v1569
        %2014 = vmatpush.msra.mxu0 %v1568
        %2015 = vmatpush.msra.mxu0 %v1567
        %2016 = vmatpush.msra.mxu0 %v1566
        %2017 = vmatpush.msra.mxu0 %v1565
        %2018 = vmatpush.msra.mxu0 %v1564
        %2019 = vmatpush.msra.mxu0 %v1563
        %2020 = vmatpush.msra.mxu0 %v1562
        %2021 = vmatpush.msra.mxu0 %v1561
        %2022 = vmatpush.msra.mxu0 %v1560
        %2023 = vmatpush.msra.mxu0 %v1559
        %2024 = vmatpush.msra.mxu0 %v1558
        %2025 = vmatpush.msra.mxu0 %v1557
        %2026 = vmatmul.f32.gmra.mxu0 %v602
        %v2027 = vpop.f32.mrf.mxu0
        %v2028 = vadd.f32 %v1915, %v2027
        %2029 = vmatmul.f32.gmra.mxu0 %v604
        %v2030 = vpop.f32.mrf.mxu0
        %v2031 = vadd.f32 %v1918, %v2030
        %2032 = vmatmul.f32.gmra.mxu0 %v606
        %v2033 = vpop.f32.mrf.mxu0
        %v2034 = vadd.f32 %v1921, %v2033
        %2035 = vmatmul.f32.gmra.mxu0 %v608
        %v2036 = vpop.f32.mrf.mxu0
        %v2037 = vadd.f32 %v1924, %v2036
        %2038 = vmatmul.f32.gmra.mxu0 %v610
        %v2039 = vpop.f32.mrf.mxu0
        %v2040 = vadd.f32 %v1927, %v2039
        %2041 = vmatmul.f32.gmra.mxu0 %v612
        %v2042 = vpop.f32.mrf.mxu0
        %v2043 = vadd.f32 %v1930, %v2042
        %2044 = vmatmul.f32.gmra.mxu0 %v614
        %v2045 = vpop.f32.mrf.mxu0
        %v2046 = vadd.f32 %v1933, %v2045
        %2047 = vmatmul.f32.gmra.mxu0 %v616
        %v2048 = vpop.f32.mrf.mxu0
        %v2049 = vadd.f32 %v1936, %v2048
        %2050 = vmatmul.f32.gmra.mxu0 %v618
        %v2051 = vpop.f32.mrf.mxu0
        %v2052 = vadd.f32 %v1939, %v2051
        %2053 = vmatmul.f32.gmra.mxu0 %v620
        %v2054 = vpop.f32.mrf.mxu0
        %v2055 = vadd.f32 %v1942, %v2054
        %2056 = vmatmul.f32.gmra.mxu0 %v622
        %v2057 = vpop.f32.mrf.mxu0
        %v2058 = vadd.f32 %v1945, %v2057
        %2059 = vmatmul.f32.gmra.mxu0 %v624
        %v2060 = vpop.f32.mrf.mxu0
        %v2061 = vadd.f32 %v1948, %v2060
        %2062 = vmatmul.f32.gmra.mxu0 %v626
        %v2063 = vpop.f32.mrf.mxu0
        %v2064 = vadd.f32 %v1951, %v2063
        %2065 = vmatmul.f32.gmra.mxu0 %v628
        %v2066 = vpop.f32.mrf.mxu0
        %v2067 = vadd.f32 %v1954, %v2066
        %2068 = vmatmul.f32.gmra.mxu0 %v630
        %v2069 = vpop.f32.mrf.mxu0
        %v2070 = vadd.f32 %v1957, %v2069
        %2071 = vmatmul.f32.gmra.mxu0 %v632
        %v2072 = vpop.f32.mrf.mxu0
        %v2073 = vadd.f32 %v1960, %v2072
        %2074 = vmatmul.f32.gmra.mxu0 %v634
        %v2075 = vpop.f32.mrf.mxu0
        %v2076 = vadd.f32 %v1963, %v2075
        %2077 = vmatmul.f32.gmra.mxu0 %v636
        %v2078 = vpop.f32.mrf.mxu0
        %v2079 = vadd.f32 %v1966, %v2078
        %2080 = vmatmul.f32.gmra.mxu0 %v638
        %v2081 = vpop.f32.mrf.mxu0
        %v2082 = vadd.f32 %v1969, %v2081
        %2083 = vmatmul.f32.gmra.mxu0 %v640
        %v2084 = vpop.f32.mrf.mxu0
        %v2085 = vadd.f32 %v1972, %v2084
        %2086 = vmatmul.f32.gmra.mxu0 %v642
        %v2087 = vpop.f32.mrf.mxu0
        %v2088 = vadd.f32 %v1975, %v2087
        %2089 = vmatmul.f32.gmra.mxu0 %v644
        %v2090 = vpop.f32.mrf.mxu0
        %v2091 = vadd.f32 %v1978, %v2090
        %2092 = vmatmul.f32.gmra.mxu0 %v646
        %v2093 = vpop.f32.mrf.mxu0
        %v2094 = vadd.f32 %v1981, %v2093
        %2095 = vmatmul.f32.gmra.mxu0 %v648
        %v2096 = vpop.f32.mrf.mxu0
        %v2097 = vadd.f32 %v1984, %v2096
        %2098 = vmatmul.f32.gmra.mxu0 %v650
        %v2099 = vpop.f32.mrf.mxu0
        %v2100 = vadd.f32 %v1987, %v2099
        %2101 = vmatmul.f32.gmra.mxu0 %v652
        %v2102 = vpop.f32.mrf.mxu0
        %v2103 = vadd.f32 %v1990, %v2102
        %2104 = vmatmul.f32.gmra.mxu0 %v654
        %v2105 = vpop.f32.mrf.mxu0
        %v2106 = vadd.f32 %v1993, %v2105
        %2107 = vmatmul.f32.gmra.mxu0 %v656
        %v2108 = vpop.f32.mrf.mxu0
        %v2109 = vadd.f32 %v1996, %v2108
        %2110 = vmatmul.f32.gmra.mxu0 %v658
        %v2111 = vpop.f32.mrf.mxu0
        %v2112 = vadd.f32 %v1999, %v2111
        %2113 = vmatmul.f32.gmra.mxu0 %v660
        %v2114 = vpop.f32.mrf.mxu0
        %v2115 = vadd.f32 %v2002, %v2114
        %2116 = vmatmul.f32.gmra.mxu0 %v662
        %v2117 = vpop.f32.mrf.mxu0
        %v2118 = vadd.f32 %v2005, %v2117
        %2119 = vmatmul.f32.gmra.mxu0 %v664
        %v2120 = vpop.f32.mrf.mxu0
        %v2121 = vadd.f32 %v2008, %v2120
        %2122 = vdwg.mxu0
        %v2123 = vld [vmem:[%s3] sm:$0xff]
        %v2124 = vld [vmem:[%s3 + $0x8] sm:$0xff]
        %v2125 = vld [vmem:[%s3 + $0x10] sm:$0xff]
        %v2126 = vld [vmem:[%s3 + $0x18] sm:$0xff]
        %v2127 = vld [vmem:[%s3 + $0x20] sm:$0xff]
        %v2128 = vld [vmem:[%s3 + $0x28] sm:$0xff]
        %v2129 = vld [vmem:[%s3 + $0x30] sm:$0xff]
        %v2130 = vld [vmem:[%s3 + $0x38] sm:$0xff]
        %v2131 = vld [vmem:[%s3 + $0x40] sm:$0xff]
        %v2132 = vld [vmem:[%s3 + $0x48] sm:$0xff]
        %v2133 = vld [vmem:[%s3 + $0x50] sm:$0xff]
        %v2134 = vld [vmem:[%s3 + $0x58] sm:$0xff]
        %v2135 = vld [vmem:[%s3 + $0x60] sm:$0xff]
        %v2136 = vld [vmem:[%s3 + $0x68] sm:$0xff]
        %v2137 = vld [vmem:[%s3 + $0x70] sm:$0xff]
        %v2138 = vld [vmem:[%s3 + $0x78] sm:$0xff]
        %v2139 = vld [vmem:[%s3 + $0x80] sm:$0xff]
        %v2140 = vld [vmem:[%s3 + $0x88] sm:$0xff]
        %v2141 = vld [vmem:[%s3 + $0x90] sm:$0xff]
        %v2142 = vld [vmem:[%s3 + $0x98] sm:$0xff]
        %v2143 = vld [vmem:[%s3 + $0xa0] sm:$0xff]
        %v2144 = vld [vmem:[%s3 + $0xa8] sm:$0xff]
        %v2145 = vld [vmem:[%s3 + $0xb0] sm:$0xff]
        %v2146 = vld [vmem:[%s3 + $0xb8] sm:$0xff]
        %v2147 = vld [vmem:[%s3 + $0xc0] sm:$0xff]
        %v2148 = vld [vmem:[%s3 + $0xc8] sm:$0xff]
        %v2149 = vld [vmem:[%s3 + $0xd0] sm:$0xff]
        %v2150 = vld [vmem:[%s3 + $0xd8] sm:$0xff]
        %v2151 = vld [vmem:[%s3 + $0xe0] sm:$0xff]
        %v2152 = vld [vmem:[%s3 + $0xe8] sm:$0xff]
        %v2153 = vld [vmem:[%s3 + $0xf0] sm:$0xff]
        %v2154 = vld [vmem:[%s3 + $0xf8] sm:$0xff]
        %v2155 = vadd.f32 %v1408, %v2028
        %v2156 = vadd.f32 %v1409, %v2031
        %v2157 = vadd.f32 %v1410, %v2034
        %v2158 = vadd.f32 %v1411, %v2037
        %v2159 = vadd.f32 %v1412, %v2040
        %v2160 = vadd.f32 %v1413, %v2043
        %v2161 = vadd.f32 %v1414, %v2046
        %v2162 = vadd.f32 %v1415, %v2049
        %v2163 = vadd.f32 %v1416, %v2052
        %v2164 = vadd.f32 %v1417, %v2055
        %v2165 = vadd.f32 %v1418, %v2058
        %v2166 = vadd.f32 %v1419, %v2061
        %v2167 = vadd.f32 %v1420, %v2064
        %v2168 = vadd.f32 %v1421, %v2067
        %v2169 = vadd.f32 %v1422, %v2070
        %v2170 = vadd.f32 %v1423, %v2073
        %v2171 = vadd.f32 %v1424, %v2076
        %v2172 = vadd.f32 %v1425, %v2079
        %v2173 = vadd.f32 %v1426, %v2082
        %v2174 = vadd.f32 %v1427, %v2085
        %v2175 = vadd.f32 %v1428, %v2088
        %v2176 = vadd.f32 %v1429, %v2091
        %v2177 = vadd.f32 %v1430, %v2094
        %v2178 = vadd.f32 %v1431, %v2097
        %v2179 = vadd.f32 %v1432, %v2100
        %v2180 = vadd.f32 %v1433, %v2103
        %v2181 = vadd.f32 %v1434, %v2106
        %v2182 = vadd.f32 %v1435, %v2109
        %v2183 = vadd.f32 %v1436, %v2112
        %v2184 = vadd.f32 %v1437, %v2115
        %v2185 = vadd.f32 %v1438, %v2118
        %v2186 = vadd.f32 %v1439, %v2121
        %2188 = vset.pattern.permute.xlu0 0
        %2189 = vperm.xlu0 %2188, %v2123
        %v2190 = vpop.permute.xlu0 %2189
        %2193 = vset.pattern.permute.xlu0 0
        %2194 = vperm.xlu0 %2193, %v2124
        %v2195 = vpop.permute.xlu0 %2194
        %2198 = vset.pattern.permute.xlu0 0
        %2199 = vperm.xlu0 %2198, %v2125
        %v2200 = vpop.permute.xlu0 %2199
        %2203 = vset.pattern.permute.xlu0 0
        %2204 = vperm.xlu0 %2203, %v2126
        %v2205 = vpop.permute.xlu0 %2204
        %2208 = vset.pattern.permute.xlu0 0
        %2209 = vperm.xlu0 %2208, %v2127
        %v2210 = vpop.permute.xlu0 %2209
        %2213 = vset.pattern.permute.xlu0 0
        %2214 = vperm.xlu0 %2213, %v2128
        %v2215 = vpop.permute.xlu0 %2214
        %2218 = vset.pattern.permute.xlu0 0
        %2219 = vperm.xlu0 %2218, %v2129
        %v2220 = vpop.permute.xlu0 %2219
        %2223 = vset.pattern.permute.xlu0 0
        %2224 = vperm.xlu0 %2223, %v2130
        %v2225 = vpop.permute.xlu0 %2224
        %2228 = vset.pattern.permute.xlu0 0
        %2229 = vperm.xlu0 %2228, %v2131
        %v2230 = vpop.permute.xlu0 %2229
        %2233 = vset.pattern.permute.xlu0 0
        %2234 = vperm.xlu0 %2233, %v2132
        %v2235 = vpop.permute.xlu0 %2234
        %2238 = vset.pattern.permute.xlu0 0
        %2239 = vperm.xlu0 %2238, %v2133
        %v2240 = vpop.permute.xlu0 %2239
        %2243 = vset.pattern.permute.xlu0 0
        %2244 = vperm.xlu0 %2243, %v2134
        %v2245 = vpop.permute.xlu0 %2244
        %2248 = vset.pattern.permute.xlu0 0
        %2249 = vperm.xlu0 %2248, %v2135
        %v2250 = vpop.permute.xlu0 %2249
        %2253 = vset.pattern.permute.xlu0 0
        %2254 = vperm.xlu0 %2253, %v2136
        %v2255 = vpop.permute.xlu0 %2254
        %2258 = vset.pattern.permute.xlu0 0
        %2259 = vperm.xlu0 %2258, %v2137
        %v2260 = vpop.permute.xlu0 %2259
        %2263 = vset.pattern.permute.xlu0 0
        %2264 = vperm.xlu0 %2263, %v2138
        %v2265 = vpop.permute.xlu0 %2264
        %2268 = vset.pattern.permute.xlu0 0
        %2269 = vperm.xlu0 %2268, %v2139
        %v2270 = vpop.permute.xlu0 %2269
        %2273 = vset.pattern.permute.xlu0 0
        %2274 = vperm.xlu0 %2273, %v2140
        %v2275 = vpop.permute.xlu0 %2274
        %2278 = vset.pattern.permute.xlu0 0
        %2279 = vperm.xlu0 %2278, %v2141
        %v2280 = vpop.permute.xlu0 %2279
        %2283 = vset.pattern.permute.xlu0 0
        %2284 = vperm.xlu0 %2283, %v2142
        %v2285 = vpop.permute.xlu0 %2284
        %2288 = vset.pattern.permute.xlu0 0
        %2289 = vperm.xlu0 %2288, %v2143
        %v2290 = vpop.permute.xlu0 %2289
        %2293 = vset.pattern.permute.xlu0 0
        %2294 = vperm.xlu0 %2293, %v2144
        %v2295 = vpop.permute.xlu0 %2294
        %2298 = vset.pattern.permute.xlu0 0
        %2299 = vperm.xlu0 %2298, %v2145
        %v2300 = vpop.permute.xlu0 %2299
        %2303 = vset.pattern.permute.xlu0 0
        %2304 = vperm.xlu0 %2303, %v2146
        %v2305 = vpop.permute.xlu0 %2304
        %2308 = vset.pattern.permute.xlu0 0
        %2309 = vperm.xlu0 %2308, %v2147
        %v2310 = vpop.permute.xlu0 %2309
        %2313 = vset.pattern.permute.xlu0 0
        %2314 = vperm.xlu0 %2313, %v2148
        %v2315 = vpop.permute.xlu0 %2314
        %2318 = vset.pattern.permute.xlu0 0
        %2319 = vperm.xlu0 %2318, %v2149
        %v2320 = vpop.permute.xlu0 %2319
        %2323 = vset.pattern.permute.xlu0 0
        %2324 = vperm.xlu0 %2323, %v2150
        %v2325 = vpop.permute.xlu0 %2324
        %2328 = vset.pattern.permute.xlu0 0
        %2329 = vperm.xlu0 %2328, %v2151
        %v2330 = vpop.permute.xlu0 %2329
        %2333 = vset.pattern.permute.xlu0 0
        %2334 = vperm.xlu0 %2333, %v2152
        %v2335 = vpop.permute.xlu0 %2334
        %2338 = vset.pattern.permute.xlu0 0
        %2339 = vperm.xlu0 %2338, %v2153
        %v2340 = vpop.permute.xlu0 %2339
        %2343 = vset.pattern.permute.xlu0 0
        %2344 = vperm.xlu0 %2343, %v2154
        %v2345 = vpop.permute.xlu0 %2344
        %v2347 = vadd.f32 %v2155, %v2190
        %v2348 = vadd.f32 %v2156, %v2195
        %v2349 = vadd.f32 %v2157, %v2200
        %v2350 = vadd.f32 %v2158, %v2205
        %v2351 = vadd.f32 %v2159, %v2210
        %v2352 = vadd.f32 %v2160, %v2215
        %v2353 = vadd.f32 %v2161, %v2220
        %v2354 = vadd.f32 %v2162, %v2225
        %v2355 = vadd.f32 %v2163, %v2230
        %v2356 = vadd.f32 %v2164, %v2235
        %v2357 = vadd.f32 %v2165, %v2240
        %v2358 = vadd.f32 %v2166, %v2245
        %v2359 = vadd.f32 %v2167, %v2250
        %v2360 = vadd.f32 %v2168, %v2255
        %v2361 = vadd.f32 %v2169, %v2260
        %v2362 = vadd.f32 %v2170, %v2265
        %v2363 = vadd.f32 %v2171, %v2270
        %v2364 = vadd.f32 %v2172, %v2275
        %v2365 = vadd.f32 %v2173, %v2280
        %v2366 = vadd.f32 %v2174, %v2285
        %v2367 = vadd.f32 %v2175, %v2290
        %v2368 = vadd.f32 %v2176, %v2295
        %v2369 = vadd.f32 %v2177, %v2300
        %v2370 = vadd.f32 %v2178, %v2305
        %v2371 = vadd.f32 %v2179, %v2310
        %v2372 = vadd.f32 %v2180, %v2315
        %v2373 = vadd.f32 %v2181, %v2320
        %v2374 = vadd.f32 %v2182, %v2325
        %v2375 = vadd.f32 %v2183, %v2330
        %v2376 = vadd.f32 %v2184, %v2335
        %v2377 = vadd.f32 %v2185, %v2340
        %v2378 = vadd.f32 %v2186, %v2345
        %2379 = vst [vmem:[%s304] sm:$0xff] %v2347
        %2380 = vst [vmem:[%s304 + $0x8] sm:$0xff] %v2348
        %2381 = vst [vmem:[%s304 + $0x10] sm:$0xff] %v2349
        %2382 = vst [vmem:[%s304 + $0x18] sm:$0xff] %v2350
        %2383 = vst [vmem:[%s304 + $0x20] sm:$0xff] %v2351
        %2384 = vst [vmem:[%s304 + $0x28] sm:$0xff] %v2352
        %2385 = vst [vmem:[%s304 + $0x30] sm:$0xff] %v2353
        %2386 = vst [vmem:[%s304 + $0x38] sm:$0xff] %v2354
        %2387 = vst [vmem:[%s304 + $0x40] sm:$0xff] %v2355
        %2388 = vst [vmem:[%s304 + $0x48] sm:$0xff] %v2356
        %2389 = vst [vmem:[%s304 + $0x50] sm:$0xff] %v2357
        %2390 = vst [vmem:[%s304 + $0x58] sm:$0xff] %v2358
        %2391 = vst [vmem:[%s304 + $0x60] sm:$0xff] %v2359
        %2392 = vst [vmem:[%s304 + $0x68] sm:$0xff] %v2360
        %2393 = vst [vmem:[%s304 + $0x70] sm:$0xff] %v2361
        %2394 = vst [vmem:[%s304 + $0x78] sm:$0xff] %v2362
        %2395 = vst [vmem:[%s304 + $0x80] sm:$0xff] %v2363
        %2396 = vst [vmem:[%s304 + $0x88] sm:$0xff] %v2364
        %2397 = vst [vmem:[%s304 + $0x90] sm:$0xff] %v2365
        %2398 = vst [vmem:[%s304 + $0x98] sm:$0xff] %v2366
        %2399 = vst [vmem:[%s304 + $0xa0] sm:$0xff] %v2367
        %2400 = vst [vmem:[%s304 + $0xa8] sm:$0xff] %v2368
        %2401 = vst [vmem:[%s304 + $0xb0] sm:$0xff] %v2369
        %2402 = vst [vmem:[%s304 + $0xb8] sm:$0xff] %v2370
        %2403 = vst [vmem:[%s304 + $0xc0] sm:$0xff] %v2371
        %2404 = vst [vmem:[%s304 + $0xc8] sm:$0xff] %v2372
        %2405 = vst [vmem:[%s304 + $0xd0] sm:$0xff] %v2373
        %2406 = vst [vmem:[%s304 + $0xd8] sm:$0xff] %v2374
        %2407 = vst [vmem:[%s304 + $0xe0] sm:$0xff] %v2375
        %2408 = vst [vmem:[%s304 + $0xe8] sm:$0xff] %v2376
        %2409 = vst [vmem:[%s304 + $0xf0] sm:$0xff] %v2377
        %2410 = vst [vmem:[%s304 + $0xf8] sm:$0xff] %v2378
        %s2411 = sand.u32 %s150, 1
        %s2412 = scalar_lea.sflag [#allocation4], %s2411
        %s2413 = sand.u32 %s150, 1
        %s2414 = smul.addr %s2413, 256
        %s2415 = scalar_lea.vmem [#allocation8], %s2414
        // Predicated region
        $region49: #{tpu_custom_call.1} parent=35 // pred_check
          %p2416 = pneg %p160
        $region50: #{tpu_custom_call.1} parent=35 // pred_check_branch
          %2418 = sbr.rel (%p2416) target = $region52
        $region51: #{tpu_custom_call.1} parent=35 // pred_region
          %2420 = vsyncadd %s2412, 0
          %s2421 = smul.addr %s28, 32
          %s2422 = sadd.s32 %s29, %s2421
          %s2423 = smul.addr %s2422, 8
          %s2424 = scalar_lea.hbm %s4, %s2423
          %s2425 = sshll.u32 %s2415, 4
          %s2426 = int_to_ptr.vmem [resolvable:$true] %s2425
          %s2427 = sshll.u32 %s2424, 4
          %s2428 = int_to_ptr.hbm [resolvable:$true] %s2427
          %2433 = dma.vmem_to_hbm [thread:$0]  %s2426, 4096, %s2428, %s2412, 128, 128, 8
        $region52: #{tpu_custom_call.1} parent=35 // pred_fallthru
          _
      $region36: #{tpu_custom_call.1} parent=5 // pred_fallthru
        _
      %p2434 = scmp.le.s32.totalorder 2, %s19
      // Predicated region
      $region53: #{tpu_custom_call.1} parent=5 // pred_check
        %p2435 = pneg %p2434
      $region54: #{tpu_custom_call.1} parent=5 // pred_check_branch
        %2437 = sbr.rel (%p2435) target = $region56
      $region55: #{tpu_custom_call.1} parent=5 // pred_region
        %s2438 = ssub.s32 %s19, 2
        // Predicated region
        $region57: #{tpu_custom_call.1} parent=55 // pred_check
          %p2439 = pneg %p166
        $region58: #{tpu_custom_call.1} parent=55 // pred_check_branch
          %2441 = sbr.rel (%p2439) target = $region60
        $region59: #{tpu_custom_call.1} parent=55 // pred_region
          %s2442 = sand.u32 %s151, 1
          %s2443 = scalar_lea.sflag [#allocation4], %s2442
          %s2444 = sand.u32 %s151, 1
          %s2445 = smul.addr %s2444, 256
          %s2446 = scalar_lea.vmem [#allocation8], %s2445
          %2448 = dma.done %s2443, 4096
        $region60: #{tpu_custom_call.1} parent=55 // pred_fallthru
          _
      $region56: #{tpu_custom_call.1} parent=5 // pred_fallthru
        _
    $region6: #{tpu_custom_call.1} parent=1 // loop_footer
      %s23 = sadd.s32 1, %s19
    $region7: #{tpu_custom_call.1} parent=1 // loop_footer_branch
      %18 = sbr.rel target = $region3
    $region8: #{tpu_custom_call.1} parent=1 // loop_exit
      _
    %2449 = vsyncpa [#allocation3], 1
    %s2450 = scalar_lea.sflag [#allocation3], 1
    %2451 = vsyncpa %s2450, 1
    %2452 = vsyncpa [#allocation6], 1
    %s2453 = scalar_lea.sflag [#allocation6], 1
    %2454 = vsyncpa %s2453, 1
    %2455 = vsyncpa [#allocation4], 1
    %s2456 = scalar_lea.sflag [#allocation4], 1
    %2457 = vsyncpa %s2456, 1

</llo_original>
